<compile_context>
chip_gen: v5e
topology: v5e:2x2
jax: 0.10.0
libtpu: 0.0.40
codegen_flags: <defaults>
</compile_context>

<pallas_src>
import numpy as np

import jax
import jax.numpy as jnp
from jax.experimental import pallas as pl
from jax.experimental.pallas import tpu as pltpu


# ---------------------------------------------------------------------------
# Fused kernel: conv1+pool+conv2+pool+fc1+fc2+fc3, S samples per grid step
# ---------------------------------------------------------------------------
def _make_simplenet_kernel(S):
    def kernel(x_ref, t1_ref, b1_ref, sc1_ref, sr1_ref,
               t2_ref, b2_ref, sc2_ref, sr2_ref,
               w1_ref, fb1_ref, w2_ref, fb2_ref, w3_ref, fb3_ref,
               out_ref, feats_ref):
        # Zero the lane-padded feature scratch.  Lanes y*128+96 .. y*128+127 are
        # never written; their fc1 weight rows are zero, but uninitialized VMEM
        # could hold NaN (0*NaN != 0), so keep the scratch clean.
        feats_ref[...] = jnp.zeros(feats_ref.shape, feats_ref.dtype)

        # ---- conv / pool feature extraction, unrolled over the S samples ----
        for s in range(S):
            x = x_ref[0, s]                                     # (32, 32)

            # conv1 (1->6, 3x3, valid) as 3 Toeplitz matmuls -> wide (30, 6*30)
            acc1 = jnp.zeros((30, 180), jnp.float32)
            for di in range(3):
                acc1 = acc1 + jnp.dot(x[di:di + 30, :], t1_ref[di],
                                      preferred_element_type=jnp.float32)
            a1 = jnp.maximum(acc1 + b1_ref[...], 0.0)           # bias + ReLU

            # 2x2/2 max-pool: shifted 4-way max + exact 0/1 selection matmuls.
            m1 = jnp.maximum(jnp.maximum(a1[0:29, 0:179], a1[1:30, 0:179]),
                             jnp.maximum(a1[0:29, 1:180], a1[1:30, 1:180]))
            p1 = jnp.dot(sr1_ref[...],
                         jnp.dot(m1, sc1_ref[...],
                                 preferred_element_type=jnp.float32),
                         preferred_element_type=jnp.float32)    # (15, 6*15)

            # conv2 (6->16, 3x3, valid) -> wide (13, 16*13)
            acc2 = jnp.zeros((13, 208), jnp.float32)
            for di in range(3):
                acc2 = acc2 + jnp.dot(p1[di:di + 13, :], t2_ref[di],
                                      preferred_element_type=jnp.float32)
            a2 = jnp.maximum(acc2 + b2_ref[...], 0.0)           # bias + ReLU

            # 2x2/2 max-pool (floor mode: drops last odd row/col per channel)
            m2 = jnp.maximum(jnp.maximum(a2[0:12, 0:207], a2[1:13, 0:207]),
                             jnp.maximum(a2[0:12, 1:208], a2[1:13, 1:208]))
            p2 = jnp.dot(sr2_ref[...],
                         jnp.dot(m2, sc2_ref[...],
                                 preferred_element_type=jnp.float32),
                         preferred_element_type=jnp.float32)    # (6, 16*6)

            # Scatter the 6 pooled rows into the lane-dense (S, 6*128) slab;
            # row y of sample s lands at lanes [y*128, y*128+96).
            for y in range(6):
                feats_ref[s:s + 1, y * 128:y * 128 + 96] = p2[y:y + 1, :]

        # ---- fused MLP head over all S samples (everything 128-lane padded) --
        h = jnp.dot(feats_ref[...], w1_ref[...],
                    preferred_element_type=jnp.float32)         # (S, 128)
        h = jnp.maximum(h + fb1_ref[...], 0.0)
        h = jnp.dot(h, w2_ref[...], preferred_element_type=jnp.float32)
        h = jnp.maximum(h + fb2_ref[...], 0.0)
        o = jnp.dot(h, w3_ref[...], preferred_element_type=jnp.float32)
        out_ref[0] = o + fb3_ref[...]                           # (S, 128)

    return kernel


def simplenet_forward(packed, x):
    """x: (B, 1, 32, 32) NCHW -> logits (B, 10)."""
    B = x.shape[0]
    x2 = x.reshape(B, x.shape[-2], x.shape[-1])                 # (B, 32, 32)

    # Samples per grid step: amortize per-step overhead, but keep >= 2 grid
    # steps for small batches so both v7x TensorCores get work.
    if B >= 16:
        S = 8
    elif B >= 2:
        S = (B + 1) // 2
    else:
        S = 1
    G = -(-B // S)
    Bp = G * S
    if Bp != B:
        x2 = jnp.pad(x2, ((0, Bp - B), (0, 0), (0, 0)))
    x4 = x2.reshape(G, S, 32, 32)

    out = pl.pallas_call(
        _make_simplenet_kernel(S),
        out_shape=jax.ShapeDtypeStruct((G, S, 128), jnp.float32),
        grid=(G,),
        in_specs=[
            pl.BlockSpec((1, S, 32, 32), lambda i: (i, 0, 0, 0)),  # input tile
            # constant-index weight operands: fetched once, kept VMEM-resident
            pl.BlockSpec((3, 32, 180), lambda i: (0, 0, 0)),    # conv1 Toeplitz
            pl.BlockSpec((1, 180), lambda i: (0, 0)),           # conv1 bias
            pl.BlockSpec((179, 90), lambda i: (0, 0)),          # pool1 col sel
            pl.BlockSpec((15, 29), lambda i: (0, 0)),           # pool1 row sel
            pl.BlockSpec((3, 90, 208), lambda i: (0, 0, 0)),    # conv2 Toeplitz
            pl.BlockSpec((1, 208), lambda i: (0, 0)),           # conv2 bias
            pl.BlockSpec((207, 96), lambda i: (0, 0)),          # pool2 col sel
            pl.BlockSpec((6, 12), lambda i: (0, 0)),            # pool2 row sel
            pl.BlockSpec((768, 128), lambda i: (0, 0)),         # fc1 (padded)
            pl.BlockSpec((1, 128), lambda i: (0, 0)),
            pl.BlockSpec((128, 128), lambda i: (0, 0)),         # fc2 (padded)
            pl.BlockSpec((1, 128), lambda i: (0, 0)),
            pl.BlockSpec((128, 128), lambda i: (0, 0)),         # fc3 (padded)
            pl.BlockSpec((1, 128), lambda i: (0, 0)),
        ],
        out_specs=pl.BlockSpec((1, S, 128), lambda i: (i, 0, 0)),
        scratch_shapes=[pltpu.VMEM((S, 6 * 128), jnp.float32)],
        compiler_params=pltpu.CompilerParams(
            dimension_semantics=("parallel",)),
    )(x4, packed["t1"], packed["b1w"], packed["sc1"], packed["sr1"],
      packed["t2"], packed["b2w"], packed["sc2"], packed["sr2"],
      packed["fc1_w"], packed["fc1_b"], packed["fc2_w"], packed["fc2_b"],
      packed["fc3_w"], packed["fc3_b"])

    return out.reshape(Bp, 128)[:B, :10]


# ---------------------------------------------------------------------------
# One-time host-side parameter packing (Toeplitz slabs, selection matrices,
# 128-lane padded / permuted FC weights).
# ---------------------------------------------------------------------------
def pack_params(params):
    w1 = np.asarray(params["conv1_w"], np.float32)   # (6, 1, 3, 3)
    b1 = np.asarray(params["conv1_b"], np.float32)
    w2 = np.asarray(params["conv2_w"], np.float32)   # (16, 6, 3, 3)
    b2 = np.asarray(params["conv2_b"], np.float32)
    fw1 = np.asarray(params["fc1_w"], np.float32)    # (120, 576)
    fb1 = np.asarray(params["fc1_b"], np.float32)
    fw2 = np.asarray(params["fc2_w"], np.float32)    # (84, 120)
    fb2 = np.asarray(params["fc2_b"], np.float32)
    fw3 = np.asarray(params["fc3_w"], np.float32)    # (10, 84)
    fb3 = np.asarray(params["fc3_b"], np.float32)

    # conv1 banded Toeplitz: t1[di, x+dj, o*30+x] = w1[o, 0, di, dj]
    t1 = np.zeros((3, 32, 6 * 30), np.float32)
    for di in range(3):
        for o in range(6):
            for xx in range(30):
                for dj in range(3):
                    t1[di, xx + dj, o * 30 + xx] = w1[o, 0, di, dj]
    b1w = np.repeat(b1, 30)[None, :]                 # (1, 180)

    # conv2 banded Toeplitz: t2[di, c*15+x+dj, o*13+x] = w2[o, c, di, dj]
    t2 = np.zeros((3, 6 * 15, 16 * 13), np.float32)
    for di in range(3):
        for o in range(16):
            for c in range(6):
                for xx in range(13):
                    for dj in range(3):
                        t2[di, c * 15 + xx + dj, o * 13 + xx] = w2[o, c, di, dj]
    b2w = np.repeat(b2, 13)[None, :]                 # (1, 208)

    # 0/1 subsample-selection matrices for the 2x2 max pools (exact in f32).
    sc1 = np.zeros((179, 90), np.float32)            # col 2k -> k
    sc1[2 * np.arange(90), np.arange(90)] = 1.0
    sr1 = np.zeros((15, 29), np.float32)             # row k <- 2k
    sr1[np.arange(15), 2 * np.arange(15)] = 1.0
    sc2 = np.zeros((207, 96), np.float32)            # col 13c+2x -> 6c+x
    for c in range(16):
        for xp in range(6):
            sc2[13 * c + 2 * xp, 6 * c + xp] = 1.0
    sr2 = np.zeros((6, 12), np.float32)
    sr2[np.arange(6), 2 * np.arange(6)] = 1.0

    # fc1: feature lane n = y*128 + (c*6 + x) maps to PyTorch flat index
    # c*36 + y*6 + x; pad outputs 120 -> 128 lanes.
    w1r = fw1.reshape(120, 16, 6, 6).transpose(2, 1, 3, 0)   # (y, c, x, out)
    w1big = np.zeros((6, 128, 128), np.float32)
    w1big[:, :96, :120] = w1r.reshape(6, 96, 120)
    w1big = w1big.reshape(768, 128)
    fb1p = np.zeros((1, 128), np.float32); fb1p[0, :120] = fb1

    # fc2 / fc3: pre-transposed, zero-padded to 128x128 (exact: padded rows
    # multiply zero activations, padded cols get zero bias then ReLU/slice).
    w2p = np.zeros((128, 128), np.float32); w2p[:120, :84] = fw2.T
    fb2p = np.zeros((1, 128), np.float32); fb2p[0, :84] = fb2
    w3p = np.zeros((128, 128), np.float32); w3p[:84, :10] = fw3.T
    fb3p = np.zeros((1, 128), np.float32); fb3p[0, :10] = fb3

    return {
        "t1": jnp.asarray(t1), "b1w": jnp.asarray(b1w),
        "sc1": jnp.asarray(sc1), "sr1": jnp.asarray(sr1),
        "t2": jnp.asarray(t2), "b2w": jnp.asarray(b2w),
        "sc2": jnp.asarray(sc2), "sr2": jnp.asarray(sr2),
        "fc1_w": jnp.asarray(w1big), "fc1_b": jnp.asarray(fb1p),
        "fc2_w": jnp.asarray(w2p), "fc2_b": jnp.asarray(fb2p),
        "fc3_w": jnp.asarray(w3p), "fc3_b": jnp.asarray(fb3p),
    }


# ---------------------------------------------------------------------------
# Parameters (deterministic, PyTorch-default-style uniform init)
# ---------------------------------------------------------------------------
def init_params(key):
    def uinit(k, shape, fan_in):
        bound = fan_in ** -0.5
        return jax.random.uniform(k, shape, jnp.float32, -bound, bound)

    ks = jax.random.split(key, 10)
    return {
        "conv1_w": uinit(ks[0], (6, 1, 3, 3), 1 * 3 * 3),
        "conv1_b": uinit(ks[1], (6,), 1 * 3 * 3),
        "conv2_w": uinit(ks[2], (16, 6, 3, 3), 6 * 3 * 3),
        "conv2_b": uinit(ks[3], (16,), 6 * 3 * 3),
        "fc1_w": uinit(ks[4], (120, 16 * 6 * 6), 16 * 6 * 6),
        "fc1_b": uinit(ks[5], (120,), 16 * 6 * 6),
        "fc2_w": uinit(ks[6], (84, 120), 120),
        "fc2_b": uinit(ks[7], (84,), 120),
        "fc3_w": uinit(ks[8], (10, 84), 84),
        "fc3_b": uinit(ks[9], (10,), 84),
    }


# ---------------------------------------------------------------------------
# Pure-JAX reference (for a numerical sanity check only)
# ---------------------------------------------------------------------------
def reference_forward(params, x):
    def conv2d(x, w, b):
        y = jax.lax.conv_general_dilated(
            x, w, window_strides=(1, 1), padding="VALID",
            dimension_numbers=("NCHW", "OIHW", "NCHW"))
        return y + b[None, :, None, None]

    def maxpool2(x):
        return jax.lax.reduce_window(
            x, -jnp.inf, jax.lax.max, (1, 1, 2, 2), (1, 1, 2, 2), "VALID")

    h = maxpool2(jax.nn.relu(conv2d(x, params["conv1_w"], params["conv1_b"])))
    h = maxpool2(jax.nn.relu(conv2d(h, params["conv2_w"], params["conv2_b"])))
    h = h.reshape(h.shape[0], -1)
    h = jax.nn.relu(h @ params["fc1_w"].T + params["fc1_b"])
    h = jax.nn.relu(h @ params["fc2_w"].T + params["fc2_b"])
    return h @ params["fc3_w"].T + params["fc3_b"]


if __name__ == "__main__":
    key = jax.random.PRNGKey(0)
    pkey, xkey = jax.random.split(key)
    params = init_params(pkey)
    packed = pack_params(params)      # one-time weight repacking, outside jit

    # fc1 expects 16*6*6 flat features -> spatial input must be 32x32, 1 channel.
    x = jax.random.normal(xkey, (2, 1, 32, 32), dtype=jnp.float32)

    fwd = jax.jit(simplenet_forward)
    out = jax.block_until_ready(fwd(packed, x))

    assert out.shape == (2, 10), out.shape
    assert out.dtype == jnp.float32

    ref = jax.block_until_ready(reference_forward(params, x))
    np.testing.assert_allclose(np.asarray(out), np.asarray(ref),
                               rtol=2e-2, atol=2e-2)
    print("KERNEL_OK")
</pallas_src>

<mosaic_0001>
module attributes {stable_mosaic.version = 11 : i64} {
  func.func @kernel(%arg0: i32, %arg1: memref<1x1x32x32xf32, #tpu.memory_space<vmem>>, %arg2: memref<3x32x180xf32, #tpu.memory_space<vmem>>, %arg3: memref<1x180xf32, #tpu.memory_space<vmem>>, %arg4: memref<179x90xf32, #tpu.memory_space<vmem>>, %arg5: memref<15x29xf32, #tpu.memory_space<vmem>>, %arg6: memref<3x90x208xf32, #tpu.memory_space<vmem>>, %arg7: memref<1x208xf32, #tpu.memory_space<vmem>>, %arg8: memref<207x96xf32, #tpu.memory_space<vmem>>, %arg9: memref<6x12xf32, #tpu.memory_space<vmem>>, %arg10: memref<768x128xf32, #tpu.memory_space<vmem>>, %arg11: memref<1x128xf32, #tpu.memory_space<vmem>>, %arg12: memref<128x128xf32, #tpu.memory_space<vmem>>, %arg13: memref<1x128xf32, #tpu.memory_space<vmem>>, %arg14: memref<128x128xf32, #tpu.memory_space<vmem>>, %arg15: memref<1x128xf32, #tpu.memory_space<vmem>>, %arg16: memref<1x1x128xf32, #tpu.memory_space<vmem>>, %arg17: memref<1x768xf32, #tpu.memory_space<vmem>>) attributes {dimension_semantics = [#tpu.dimension_semantics<parallel>], iteration_bounds = array<i64: 2>, scalar_prefetch = 0 : i64, scratch_operands = 1 : i64, tpu.core_type = #tpu.core_type<tc>, window_params = [{transform_indices = @transform_0, window_bounds = array<i64: 1, 1, 32, 32>}, {pipeline_mode = #tpu.pipeline_mode<synchronous>, transform_indices = @transform_1, window_bounds = array<i64: 3, 32, 180>}, {pipeline_mode = #tpu.pipeline_mode<synchronous>, transform_indices = @transform_2, window_bounds = array<i64: 1, 180>}, {pipeline_mode = #tpu.pipeline_mode<synchronous>, transform_indices = @transform_3, window_bounds = array<i64: 179, 90>}, {pipeline_mode = #tpu.pipeline_mode<synchronous>, transform_indices = @transform_4, window_bounds = array<i64: 15, 29>}, {pipeline_mode = #tpu.pipeline_mode<synchronous>, transform_indices = @transform_5, window_bounds = array<i64: 3, 90, 208>}, {pipeline_mode = #tpu.pipeline_mode<synchronous>, transform_indices = @transform_6, window_bounds = array<i64: 1, 208>}, {pipeline_mode = #tpu.pipeline_mode<synchronous>, transform_indices = @transform_7, window_bounds = array<i64: 207, 96>}, {pipeline_mode = #tpu.pipeline_mode<synchronous>, transform_indices = @transform_8, window_bounds = array<i64: 6, 12>}, {pipeline_mode = #tpu.pipeline_mode<synchronous>, transform_indices = @transform_9, window_bounds = array<i64: 768, 128>}, {pipeline_mode = #tpu.pipeline_mode<synchronous>, transform_indices = @transform_10, window_bounds = array<i64: 1, 128>}, {pipeline_mode = #tpu.pipeline_mode<synchronous>, transform_indices = @transform_11, window_bounds = array<i64: 128, 128>}, {pipeline_mode = #tpu.pipeline_mode<synchronous>, transform_indices = @transform_12, window_bounds = array<i64: 1, 128>}, {pipeline_mode = #tpu.pipeline_mode<synchronous>, transform_indices = @transform_13, window_bounds = array<i64: 128, 128>}, {pipeline_mode = #tpu.pipeline_mode<synchronous>, transform_indices = @transform_14, window_bounds = array<i64: 1, 128>}, {transform_indices = @transform_15, window_bounds = array<i64: 1, 1, 128>}]} {
    %cst = arith.constant 0.000000e+00 : f32
    %0 = vector.broadcast %cst : f32 to vector<1x768xf32>
    %c0 = arith.constant 0 : index
    %c0_0 = arith.constant 0 : index
    %1 = vector.load %arg17[%c0, %c0_0] : memref<1x768xf32, #tpu.memory_space<vmem>>, vector<1x768xf32>
    tpu.vector_store %arg17[%c0, %c0_0], %0 {strides = array<i32>} : memref<1x768xf32, #tpu.memory_space<vmem>>, vector<1x768xf32>,
    %c0_1 = arith.constant 0 : index
    %c0_2 = arith.constant 0 : index
    %c0_3 = arith.constant 0 : index
    %c0_4 = arith.constant 0 : index
    %2 = vector.load %arg1[%c0_1, %c0_2, %c0_3, %c0_4] : memref<1x1x32x32xf32, #tpu.memory_space<vmem>>, vector<1x1x32x32xf32>
    %3 = vector.shape_cast %2 : vector<1x1x32x32xf32> to vector<32x32xf32>
    %cst_5 = arith.constant 0.000000e+00 : f32
    %4 = vector.broadcast %cst_5 : f32 to vector<30x180xf32>
    %5 = vector.extract_strided_slice %3 {offsets = [0, 0], sizes = [30, 32], strides = [1, 1]} : vector<32x32xf32> to vector<30x32xf32>
    %c0_6 = arith.constant 0 : index
    %c0_7 = arith.constant 0 : index
    %c0_8 = arith.constant 0 : index
    %6 = vector.load %arg2[%c0_6, %c0_7, %c0_8] : memref<3x32x180xf32, #tpu.memory_space<vmem>>, vector<1x32x180xf32>
    %7 = vector.shape_cast %6 : vector<1x32x180xf32> to vector<32x180xf32>
    %cst_9 = arith.constant dense<0.000000e+00> : vector<30x180xf32>
    %8 = tpu.matmul %5, %7, %cst_9 {dimension_numbers = #tpu.dot_dimension_numbers<[1], [0], [0], [1], [0, 0, 1, 1], [], []>} : vector<30x32xf32>, vector<32x180xf32>, vector<30x180xf32> -> vector<30x180xf32>
    %9 = arith.addf %4, %8 : vector<30x180xf32>
    %10 = vector.extract_strided_slice %3 {offsets = [1, 0], sizes = [30, 32], strides = [1, 1]} : vector<32x32xf32> to vector<30x32xf32>
    %c1 = arith.constant 1 : index
    %c0_10 = arith.constant 0 : index
    %c0_11 = arith.constant 0 : index
    %11 = vector.load %arg2[%c1, %c0_10, %c0_11] : memref<3x32x180xf32, #tpu.memory_space<vmem>>, vector<1x32x180xf32>
    %12 = vector.shape_cast %11 : vector<1x32x180xf32> to vector<32x180xf32>
    %cst_12 = arith.constant dense<0.000000e+00> : vector<30x180xf32>
    %13 = tpu.matmul %10, %12, %cst_12 {dimension_numbers = #tpu.dot_dimension_numbers<[1], [0], [0], [1], [0, 0, 1, 1], [], []>} : vector<30x32xf32>, vector<32x180xf32>, vector<30x180xf32> -> vector<30x180xf32>
    %14 = arith.addf %9, %13 : vector<30x180xf32>
    %15 = vector.extract_strided_slice %3 {offsets = [2, 0], sizes = [30, 32], strides = [1, 1]} : vector<32x32xf32> to vector<30x32xf32>
    %c2 = arith.constant 2 : index
    %c0_13 = arith.constant 0 : index
    %c0_14 = arith.constant 0 : index
    %16 = vector.load %arg2[%c2, %c0_13, %c0_14] : memref<3x32x180xf32, #tpu.memory_space<vmem>>, vector<1x32x180xf32>
    %17 = vector.shape_cast %16 : vector<1x32x180xf32> to vector<32x180xf32>
    %cst_15 = arith.constant dense<0.000000e+00> : vector<30x180xf32>
    %18 = tpu.matmul %15, %17, %cst_15 {dimension_numbers = #tpu.dot_dimension_numbers<[1], [0], [0], [1], [0, 0, 1, 1], [], []>} : vector<30x32xf32>, vector<32x180xf32>, vector<30x180xf32> -> vector<30x180xf32>
    %19 = arith.addf %14, %18 : vector<30x180xf32>
    %c0_16 = arith.constant 0 : index
    %c0_17 = arith.constant 0 : index
    %20 = vector.load %arg3[%c0_16, %c0_17] : memref<1x180xf32, #tpu.memory_space<vmem>>, vector<1x180xf32>
    %21 = vector.broadcast %20 : vector<1x180xf32> to vector<30x180xf32>
    %22 = arith.addf %19, %21 : vector<30x180xf32>
    %cst_18 = arith.constant 0.000000e+00 : f32
    %23 = vector.broadcast %cst_18 : f32 to vector<30x180xf32>
    %24 = arith.maximumf %22, %23 : vector<30x180xf32>
    %25 = vector.extract_strided_slice %24 {offsets = [0, 0], sizes = [29, 179], strides = [1, 1]} : vector<30x180xf32> to vector<29x179xf32>
    %26 = vector.extract_strided_slice %24 {offsets = [1, 0], sizes = [29, 179], strides = [1, 1]} : vector<30x180xf32> to vector<29x179xf32>
    %27 = arith.maximumf %25, %26 : vector<29x179xf32>
    %28 = vector.extract_strided_slice %24 {offsets = [0, 1], sizes = [29, 179], strides = [1, 1]} : vector<30x180xf32> to vector<29x179xf32>
    %29 = vector.extract_strided_slice %24 {offsets = [1, 1], sizes = [29, 179], strides = [1, 1]} : vector<30x180xf32> to vector<29x179xf32>
    %30 = arith.maximumf %28, %29 : vector<29x179xf32>
    %31 = arith.maximumf %27, %30 : vector<29x179xf32>
    %c0_19 = arith.constant 0 : index
    %c0_20 = arith.constant 0 : index
    %32 = vector.load %arg5[%c0_19, %c0_20] : memref<15x29xf32, #tpu.memory_space<vmem>>, vector<15x29xf32>
    %c0_21 = arith.constant 0 : index
    %c0_22 = arith.constant 0 : index
    %33 = vector.load %arg4[%c0_21, %c0_22] : memref<179x90xf32, #tpu.memory_space<vmem>>, vector<179x90xf32>
    %cst_23 = arith.constant dense<0.000000e+00> : vector<29x90xf32>
    %34 = tpu.matmul %31, %33, %cst_23 {dimension_numbers = #tpu.dot_dimension_numbers<[1], [0], [0], [1], [0, 0, 1, 1], [], []>} : vector<29x179xf32>, vector<179x90xf32>, vector<29x90xf32> -> vector<29x90xf32>
    %cst_24 = arith.constant dense<0.000000e+00> : vector<15x90xf32>
    %35 = tpu.matmul %32, %34, %cst_24 {dimension_numbers = #tpu.dot_dimension_numbers<[1], [0], [0], [1], [0, 0, 1, 1], [], []>} : vector<15x29xf32>, vector<29x90xf32>, vector<15x90xf32> -> vector<15x90xf32>
    %cst_25 = arith.constant 0.000000e+00 : f32
    %36 = vector.broadcast %cst_25 : f32 to vector<13x208xf32>
    %37 = vector.extract_strided_slice %35 {offsets = [0, 0], sizes = [13, 90], strides = [1, 1]} : vector<15x90xf32> to vector<13x90xf32>
    %c0_26 = arith.constant 0 : index
    %c0_27 = arith.constant 0 : index
    %c0_28 = arith.constant 0 : index
    %38 = vector.load %arg6[%c0_26, %c0_27, %c0_28] : memref<3x90x208xf32, #tpu.memory_space<vmem>>, vector<1x90x208xf32>
    %39 = vector.shape_cast %38 : vector<1x90x208xf32> to vector<90x208xf32>
    %cst_29 = arith.constant dense<0.000000e+00> : vector<13x208xf32>
    %40 = tpu.matmul %37, %39, %cst_29 {dimension_numbers = #tpu.dot_dimension_numbers<[1], [0], [0], [1], [0, 0, 1, 1], [], []>} : vector<13x90xf32>, vector<90x208xf32>, vector<13x208xf32> -> vector<13x208xf32>
    %41 = arith.addf %36, %40 : vector<13x208xf32>
    %42 = vector.extract_strided_slice %35 {offsets = [1, 0], sizes = [13, 90], strides = [1, 1]} : vector<15x90xf32> to vector<13x90xf32>
    %c1_30 = arith.constant 1 : index
    %c0_31 = arith.constant 0 : index
    %c0_32 = arith.constant 0 : index
    %43 = vector.load %arg6[%c1_30, %c0_31, %c0_32] : memref<3x90x208xf32, #tpu.memory_space<vmem>>, vector<1x90x208xf32>
    %44 = vector.shape_cast %43 : vector<1x90x208xf32> to vector<90x208xf32>
    %cst_33 = arith.constant dense<0.000000e+00> : vector<13x208xf32>
    %45 = tpu.matmul %42, %44, %cst_33 {dimension_numbers = #tpu.dot_dimension_numbers<[1], [0], [0], [1], [0, 0, 1, 1], [], []>} : vector<13x90xf32>, vector<90x208xf32>, vector<13x208xf32> -> vector<13x208xf32>
    %46 = arith.addf %41, %45 : vector<13x208xf32>
    %47 = vector.extract_strided_slice %35 {offsets = [2, 0], sizes = [13, 90], strides = [1, 1]} : vector<15x90xf32> to vector<13x90xf32>
    %c2_34 = arith.constant 2 : index
    %c0_35 = arith.constant 0 : index
    %c0_36 = arith.constant 0 : index
    %48 = vector.load %arg6[%c2_34, %c0_35, %c0_36] : memref<3x90x208xf32, #tpu.memory_space<vmem>>, vector<1x90x208xf32>
    %49 = vector.shape_cast %48 : vector<1x90x208xf32> to vector<90x208xf32>
    %cst_37 = arith.constant dense<0.000000e+00> : vector<13x208xf32>
    %50 = tpu.matmul %47, %49, %cst_37 {dimension_numbers = #tpu.dot_dimension_numbers<[1], [0], [0], [1], [0, 0, 1, 1], [], []>} : vector<13x90xf32>, vector<90x208xf32>, vector<13x208xf32> -> vector<13x208xf32>
    %51 = arith.addf %46, %50 : vector<13x208xf32>
    %c0_38 = arith.constant 0 : index
    %c0_39 = arith.constant 0 : index
    %52 = vector.load %arg7[%c0_38, %c0_39] : memref<1x208xf32, #tpu.memory_space<vmem>>, vector<1x208xf32>
    %53 = vector.broadcast %52 : vector<1x208xf32> to vector<13x208xf32>
    %54 = arith.addf %51, %53 : vector<13x208xf32>
    %cst_40 = arith.constant 0.000000e+00 : f32
    %55 = vector.broadcast %cst_40 : f32 to vector<13x208xf32>
    %56 = arith.maximumf %54, %55 : vector<13x208xf32>
    %57 = vector.extract_strided_slice %56 {offsets = [0, 0], sizes = [12, 207], strides = [1, 1]} : vector<13x208xf32> to vector<12x207xf32>
    %58 = vector.extract_strided_slice %56 {offsets = [1, 0], sizes = [12, 207], strides = [1, 1]} : vector<13x208xf32> to vector<12x207xf32>
    %59 = arith.maximumf %57, %58 : vector<12x207xf32>
    %60 = vector.extract_strided_slice %56 {offsets = [0, 1], sizes = [12, 207], strides = [1, 1]} : vector<13x208xf32> to vector<12x207xf32>
    %61 = vector.extract_strided_slice %56 {offsets = [1, 1], sizes = [12, 207], strides = [1, 1]} : vector<13x208xf32> to vector<12x207xf32>
    %62 = arith.maximumf %60, %61 : vector<12x207xf32>
    %63 = arith.maximumf %59, %62 : vector<12x207xf32>
    %c0_41 = arith.constant 0 : index
    %c0_42 = arith.constant 0 : index
    %64 = vector.load %arg9[%c0_41, %c0_42] : memref<6x12xf32, #tpu.memory_space<vmem>>, vector<6x12xf32>
    %c0_43 = arith.constant 0 : index
    %c0_44 = arith.constant 0 : index
    %65 = vector.load %arg8[%c0_43, %c0_44] : memref<207x96xf32, #tpu.memory_space<vmem>>, vector<207x96xf32>
    %cst_45 = arith.constant dense<0.000000e+00> : vector<12x96xf32>
    %66 = tpu.matmul %63, %65, %cst_45 {dimension_numbers = #tpu.dot_dimension_numbers<[1], [0], [0], [1], [0, 0, 1, 1], [], []>} : vector<12x207xf32>, vector<207x96xf32>, vector<12x96xf32> -> vector<12x96xf32>
    %cst_46 = arith.constant dense<0.000000e+00> : vector<6x96xf32>
    %67 = tpu.matmul %64, %66, %cst_46 {dimension_numbers = #tpu.dot_dimension_numbers<[1], [0], [0], [1], [0, 0, 1, 1], [], []>} : vector<6x12xf32>, vector<12x96xf32>, vector<6x96xf32> -> vector<6x96xf32>
    %68 = vector.extract_strided_slice %67 {offsets = [0, 0], sizes = [1, 96], strides = [1, 1]} : vector<6x96xf32> to vector<1x96xf32>
    %c0_47 = arith.constant 0 : index
    %c0_48 = arith.constant 0 : index
    %69 = vector.load %arg17[%c0_47, %c0_48] : memref<1x768xf32, #tpu.memory_space<vmem>>, vector<1x96xf32>
    tpu.vector_store %arg17[%c0_47, %c0_48], %68 {strides = array<i32>} : memref<1x768xf32, #tpu.memory_space<vmem>>, vector<1x96xf32>,
    %70 = vector.extract_strided_slice %67 {offsets = [1, 0], sizes = [1, 96], strides = [1, 1]} : vector<6x96xf32> to vector<1x96xf32>
    %c0_49 = arith.constant 0 : index
    %c128 = arith.constant 128 : index
    %71 = vector.load %arg17[%c0_49, %c128] : memref<1x768xf32, #tpu.memory_space<vmem>>, vector<1x96xf32>
    tpu.vector_store %arg17[%c0_49, %c128], %70 {strides = array<i32>} : memref<1x768xf32, #tpu.memory_space<vmem>>, vector<1x96xf32>,
    %72 = vector.extract_strided_slice %67 {offsets = [2, 0], sizes = [1, 96], strides = [1, 1]} : vector<6x96xf32> to vector<1x96xf32>
    %c0_50 = arith.constant 0 : index
    %c256 = arith.constant 256 : index
    %73 = vector.load %arg17[%c0_50, %c256] : memref<1x768xf32, #tpu.memory_space<vmem>>, vector<1x96xf32>
    tpu.vector_store %arg17[%c0_50, %c256], %72 {strides = array<i32>} : memref<1x768xf32, #tpu.memory_space<vmem>>, vector<1x96xf32>,
    %74 = vector.extract_strided_slice %67 {offsets = [3, 0], sizes = [1, 96], strides = [1, 1]} : vector<6x96xf32> to vector<1x96xf32>
    %c0_51 = arith.constant 0 : index
    %c384 = arith.constant 384 : index
    %75 = vector.load %arg17[%c0_51, %c384] : memref<1x768xf32, #tpu.memory_space<vmem>>, vector<1x96xf32>
    tpu.vector_store %arg17[%c0_51, %c384], %74 {strides = array<i32>} : memref<1x768xf32, #tpu.memory_space<vmem>>, vector<1x96xf32>,
    %76 = vector.extract_strided_slice %67 {offsets = [4, 0], sizes = [1, 96], strides = [1, 1]} : vector<6x96xf32> to vector<1x96xf32>
    %c0_52 = arith.constant 0 : index
    %c512 = arith.constant 512 : index
    %77 = vector.load %arg17[%c0_52, %c512] : memref<1x768xf32, #tpu.memory_space<vmem>>, vector<1x96xf32>
    tpu.vector_store %arg17[%c0_52, %c512], %76 {strides = array<i32>} : memref<1x768xf32, #tpu.memory_space<vmem>>, vector<1x96xf32>,
    %78 = vector.extract_strided_slice %67 {offsets = [5, 0], sizes = [1, 96], strides = [1, 1]} : vector<6x96xf32> to vector<1x96xf32>
    %c0_53 = arith.constant 0 : index
    %c640 = arith.constant 640 : index
    %79 = vector.load %arg17[%c0_53, %c640] : memref<1x768xf32, #tpu.memory_space<vmem>>, vector<1x96xf32>
    tpu.vector_store %arg17[%c0_53, %c640], %78 {strides = array<i32>} : memref<1x768xf32, #tpu.memory_space<vmem>>, vector<1x96xf32>,
    %c0_54 = arith.constant 0 : index
    %c0_55 = arith.constant 0 : index
    %80 = vector.load %arg17[%c0_54, %c0_55] : memref<1x768xf32, #tpu.memory_space<vmem>>, vector<1x768xf32>
    %c0_56 = arith.constant 0 : index
    %c0_57 = arith.constant 0 : index
    %81 = vector.load %arg10[%c0_56, %c0_57] : memref<768x128xf32, #tpu.memory_space<vmem>>, vector<768x128xf32>
    %cst_58 = arith.constant dense<0.000000e+00> : vector<1x128xf32>
    %82 = tpu.matmul %80, %81, %cst_58 {dimension_numbers = #tpu.dot_dimension_numbers<[1], [0], [0], [1], [0, 0, 1, 1], [], []>} : vector<1x768xf32>, vector<768x128xf32>, vector<1x128xf32> -> vector<1x128xf32>
    %c0_59 = arith.constant 0 : index
    %c0_60 = arith.constant 0 : index
    %83 = vector.load %arg11[%c0_59, %c0_60] : memref<1x128xf32, #tpu.memory_space<vmem>>, vector<1x128xf32>
    %84 = arith.addf %82, %83 : vector<1x128xf32>
    %cst_61 = arith.constant 0.000000e+00 : f32
    %85 = vector.broadcast %cst_61 : f32 to vector<1x128xf32>
    %86 = arith.maximumf %84, %85 : vector<1x128xf32>
    %c0_62 = arith.constant 0 : index
    %c0_63 = arith.constant 0 : index
    %87 = vector.load %arg12[%c0_62, %c0_63] : memref<128x128xf32, #tpu.memory_space<vmem>>, vector<128x128xf32>
    %cst_64 = arith.constant dense<0.000000e+00> : vector<1x128xf32>
    %88 = tpu.matmul %86, %87, %cst_64 {dimension_numbers = #tpu.dot_dimension_numbers<[1], [0], [0], [1], [0, 0, 1, 1], [], []>} : vector<1x128xf32>, vector<128x128xf32>, vector<1x128xf32> -> vector<1x128xf32>
    %c0_65 = arith.constant 0 : index
    %c0_66 = arith.constant 0 : index
    %89 = vector.load %arg13[%c0_65, %c0_66] : memref<1x128xf32, #tpu.memory_space<vmem>>, vector<1x128xf32>
    %90 = arith.addf %88, %89 : vector<1x128xf32>
    %cst_67 = arith.constant 0.000000e+00 : f32
    %91 = vector.broadcast %cst_67 : f32 to vector<1x128xf32>
    %92 = arith.maximumf %90, %91 : vector<1x128xf32>
    %c0_68 = arith.constant 0 : index
    %c0_69 = arith.constant 0 : index
    %93 = vector.load %arg14[%c0_68, %c0_69] : memref<128x128xf32, #tpu.memory_space<vmem>>, vector<128x128xf32>
    %cst_70 = arith.constant dense<0.000000e+00> : vector<1x128xf32>
    %94 = tpu.matmul %92, %93, %cst_70 {dimension_numbers = #tpu.dot_dimension_numbers<[1], [0], [0], [1], [0, 0, 1, 1], [], []>} : vector<1x128xf32>, vector<128x128xf32>, vector<1x128xf32> -> vector<1x128xf32>
    %c0_71 = arith.constant 0 : index
    %c0_72 = arith.constant 0 : index
    %95 = vector.load %arg15[%c0_71, %c0_72] : memref<1x128xf32, #tpu.memory_space<vmem>>, vector<1x128xf32>
    %96 = arith.addf %94, %95 : vector<1x128xf32>
    %c0_73 = arith.constant 0 : index
    %c0_74 = arith.constant 0 : index
    %c0_75 = arith.constant 0 : index
    %97 = vector.load %arg16[%c0_73, %c0_74, %c0_75] : memref<1x1x128xf32, #tpu.memory_space<vmem>>, vector<1x1x128xf32>
    %98 = vector.shape_cast %97 : vector<1x1x128xf32> to vector<1x128xf32>
    %99 = vector.shape_cast %96 : vector<1x128xf32> to vector<1x1x128xf32>
    tpu.vector_store %arg16[%c0_73, %c0_74, %c0_75], %99 {strides = array<i32>} : memref<1x1x128xf32, #tpu.memory_space<vmem>>, vector<1x1x128xf32>,
    return
  }
  func.func @transform_0(%arg0: i32) -> (i32, i32, i32, i32) {
    %c0_i32 = arith.constant 0 : i32
    %c0_i32_0 = arith.constant 0 : i32
    %c0_i32_1 = arith.constant 0 : i32
    %c0_i32_2 = arith.constant 0 : i32
    return %arg0, %c0_i32, %c0_i32_0, %c0_i32_1 : i32, i32, i32, i32
  }
  func.func @transform_1(%arg0: i32) -> (i32, i32, i32) {
    %c0_i32 = arith.constant 0 : i32
    %c0_i32_0 = arith.constant 0 : i32
    %c0_i32_1 = arith.constant 0 : i32
    %c0_i32_2 = arith.constant 0 : i32
    return %c0_i32, %c0_i32_0, %c0_i32_1 : i32, i32, i32
  }
  func.func @transform_2(%arg0: i32) -> (i32, i32) {
    %c0_i32 = arith.constant 0 : i32
    %c0_i32_0 = arith.constant 0 : i32
    %c0_i32_1 = arith.constant 0 : i32
    return %c0_i32, %c0_i32_0 : i32, i32
  }
  func.func @transform_3(%arg0: i32) -> (i32, i32) {
    %c0_i32 = arith.constant 0 : i32
    %c0_i32_0 = arith.constant 0 : i32
    %c0_i32_1 = arith.constant 0 : i32
    return %c0_i32, %c0_i32_0 : i32, i32
  }
  func.func @transform_4(%arg0: i32) -> (i32, i32) {
    %c0_i32 = arith.constant 0 : i32
    %c0_i32_0 = arith.constant 0 : i32
    %c0_i32_1 = arith.constant 0 : i32
    return %c0_i32, %c0_i32_0 : i32, i32
  }
  func.func @transform_5(%arg0: i32) -> (i32, i32, i32) {
    %c0_i32 = arith.constant 0 : i32
    %c0_i32_0 = arith.constant 0 : i32
    %c0_i32_1 = arith.constant 0 : i32
    %c0_i32_2 = arith.constant 0 : i32
    return %c0_i32, %c0_i32_0, %c0_i32_1 : i32, i32, i32
  }
  func.func @transform_6(%arg0: i32) -> (i32, i32) {
    %c0_i32 = arith.constant 0 : i32
    %c0_i32_0 = arith.constant 0 : i32
    %c0_i32_1 = arith.constant 0 : i32
    return %c0_i32, %c0_i32_0 : i32, i32
  }
  func.func @transform_7(%arg0: i32) -> (i32, i32) {
    %c0_i32 = arith.constant 0 : i32
    %c0_i32_0 = arith.constant 0 : i32
    %c0_i32_1 = arith.constant 0 : i32
    return %c0_i32, %c0_i32_0 : i32, i32
  }
  func.func @transform_8(%arg0: i32) -> (i32, i32) {
    %c0_i32 = arith.constant 0 : i32
    %c0_i32_0 = arith.constant 0 : i32
    %c0_i32_1 = arith.constant 0 : i32
    return %c0_i32, %c0_i32_0 : i32, i32
  }
  func.func @transform_9(%arg0: i32) -> (i32, i32) {
    %c0_i32 = arith.constant 0 : i32
    %c0_i32_0 = arith.constant 0 : i32
    %c0_i32_1 = arith.constant 0 : i32
    return %c0_i32, %c0_i32_0 : i32, i32
  }
  func.func @transform_10(%arg0: i32) -> (i32, i32) {
    %c0_i32 = arith.constant 0 : i32
    %c0_i32_0 = arith.constant 0 : i32
    %c0_i32_1 = arith.constant 0 : i32
    return %c0_i32, %c0_i32_0 : i32, i32
  }
  func.func @transform_11(%arg0: i32) -> (i32, i32) {
    %c0_i32 = arith.constant 0 : i32
    %c0_i32_0 = arith.constant 0 : i32
    %c0_i32_1 = arith.constant 0 : i32
    return %c0_i32, %c0_i32_0 : i32, i32
  }
  func.func @transform_12(%arg0: i32) -> (i32, i32) {
    %c0_i32 = arith.constant 0 : i32
    %c0_i32_0 = arith.constant 0 : i32
    %c0_i32_1 = arith.constant 0 : i32
    return %c0_i32, %c0_i32_0 : i32, i32
  }
  func.func @transform_13(%arg0: i32) -> (i32, i32) {
    %c0_i32 = arith.constant 0 : i32
    %c0_i32_0 = arith.constant 0 : i32
    %c0_i32_1 = arith.constant 0 : i32
    return %c0_i32, %c0_i32_0 : i32, i32
  }
  func.func @transform_14(%arg0: i32) -> (i32, i32) {
    %c0_i32 = arith.constant 0 : i32
    %c0_i32_0 = arith.constant 0 : i32
    %c0_i32_1 = arith.constant 0 : i32
    return %c0_i32, %c0_i32_0 : i32, i32
  }
  func.func @transform_15(%arg0: i32) -> (i32, i32, i32) {
    %c0_i32 = arith.constant 0 : i32
    %c0_i32_0 = arith.constant 0 : i32
    %c0_i32_1 = arith.constant 0 : i32
    return %arg0, %c0_i32, %c0_i32_0 : i32, i32, i32
  }
}

</mosaic_0001>

<llo_original>
// kernel: simplenet_forward.1
$region0: #{simplenet_forward.1}
  #allocation0 [shape = 'u32[]', space=smem, size = 0x4, offset = 0x4, fixed_abs, tag = 'smem constant byte address 0x4 - core index']
  #allocation1 [shape = 'u32[72,128]{1,0:T(1,128)}', space=vmem, size = 0x9000, scoped, tag = 'internal scratch']
  #allocation2 [shape = 'f32[1,768]{1,0:T(1,128)}', space=vmem, size = 0xc00, scoped, tag = 'scratch operand']
  %s0 = inlined_call_operand.hbm [shape: f32[2,1,32,32], index: 0, kind: input, shape index: {}]
  %s1 = inlined_call_operand.vmem [shape: f32[3,32,180], index: 1, kind: input, shape index: {}]
  %s2 = inlined_call_operand.hbm [shape: f32[1,180], index: 2, kind: input, shape index: {}]
  %s3 = inlined_call_operand.vmem [shape: f32[179,90], index: 3, kind: input, shape index: {}]
  %s4 = inlined_call_operand.vmem [shape: f32[15,29], index: 4, kind: input, shape index: {}]
  %s5 = inlined_call_operand.hbm [shape: f32[3,90,208], index: 5, kind: input, shape index: {}]
  %s6 = inlined_call_operand.hbm [shape: f32[1,208], index: 6, kind: input, shape index: {}]
  %s7 = inlined_call_operand.vmem [shape: f32[207,96], index: 7, kind: input, shape index: {}]
  %s8 = inlined_call_operand.vmem [shape: f32[6,12], index: 8, kind: input, shape index: {}]
  %s9 = inlined_call_operand.hbm [shape: f32[768,128], index: 9, kind: input, shape index: {}]
  %s10 = inlined_call_operand.hbm [shape: f32[1,128], index: 10, kind: input, shape index: {}]
  %s11 = inlined_call_operand.hbm [shape: f32[128,128], index: 11, kind: input, shape index: {}]
  %s12 = inlined_call_operand.hbm [shape: f32[1,128], index: 12, kind: input, shape index: {}]
  %s13 = inlined_call_operand.hbm [shape: f32[128,128], index: 13, kind: input, shape index: {}]
  %s14 = inlined_call_operand.vmem [shape: f32[1,128], index: 14, kind: input, shape index: {}]
  %s15 = inlined_call_operand.hbm [shape: f32[2,1,128], index: 15, kind: output, shape index: {}]
  %s16 = sld [smem:[#allocation0]]
  $region129: #{simplenet_forward.1} parent=0
    _
  %s18 = ssub.s32 1, %s16
  %s19 = scalar_select 0, %s18, %s16
  $region1: #{simplenet_forward.1} parent=0
    #allocation3 [shape = 'u8[32768]{0}', space=vmem, size = 0x8000, scoped, tag = 'input window, operand 0']
    #allocation4 [shape = 's32[2]{0}', space=sflag, size = 0x8, scoped, tag = 'scoped memory for simplenet_forward.1']
    #allocation5 [shape = 's32[2]{0}', space=sflag, size = 0x8, scoped, tag = 'scoped memory for simplenet_forward.1']
    #allocation6 [shape = 'u8[1024]{0}', space=vmem, size = 0x400, scoped, tag = 'input window, operand 2, single buffered']
    #allocation7 [shape = 's32[1]{0}', space=sflag, size = 0x4, scoped, tag = 'scoped memory for simplenet_forward.1']
    #allocation8 [shape = 'u8[294912]{0}', space=vmem, size = 0x48000, scoped, tag = 'input window, operand 5, single buffered']
    #allocation9 [shape = 'u8[1024]{0}', space=vmem, size = 0x400, scoped, tag = 'input window, operand 6, single buffered']
    #allocation10 [shape = 's32[1]{0}', space=sflag, size = 0x4, scoped, tag = 'scoped memory for simplenet_forward.1']
    #allocation11 [shape = 'u8[393216]{0}', space=vmem, size = 0x60000, scoped, tag = 'input window, operand 9, single buffered']
    #allocation12 [shape = 'u8[512]{0}', space=vmem, size = 0x400, scoped, tag = 'input window, operand 10, single buffered']
    #allocation13 [shape = 's32[1]{0}', space=sflag, size = 0x4, scoped, tag = 'scoped memory for simplenet_forward.1']
    #allocation14 [shape = 'u8[65536]{0}', space=vmem, size = 0x10000, scoped, tag = 'input window, operand 11, single buffered']
    #allocation15 [shape = 'u8[512]{0}', space=vmem, size = 0x400, scoped, tag = 'input window, operand 12, single buffered']
    #allocation16 [shape = 's32[1]{0}', space=sflag, size = 0x4, scoped, tag = 'scoped memory for simplenet_forward.1']
    #allocation17 [shape = 'u8[65536]{0}', space=vmem, size = 0x10000, scoped, tag = 'input window, operand 13, single buffered']
    #allocation18 [shape = 'u8[1024]{0}', space=vmem, size = 0x400, scoped, tag = 'output window, operand 0']
    %20 = vsyncpa [#allocation4], 0
    %s21 = scalar_lea.sflag [#allocation4], 1
    %22 = vsyncpa %s21, 0
    %23 = vsyncpa [#allocation7], 0
    %24 = vsyncpa [#allocation10], 0
    %25 = vsyncpa [#allocation13], 0
    %26 = vsyncpa [#allocation16], 0
    %27 = vsyncpa [#allocation5], 0
    %s28 = scalar_lea.sflag [#allocation5], 1
    %29 = vsyncpa %s28, 0
    loop: start=0, step=1, limit=4
    $region2: #{simplenet_forward.1} parent=1 // loop_pre_header
      _
    $region3: #{simplenet_forward.1} parent=1 // loop_header
      %s31 = sphi 0, %s35
      %p32 = scmp.ge.s32.totalorder %s31, 4
      %s41 = sphi 0, %s43
      %s44 = sphi 0, %s41
      %s45 = sphi 0, %s44
      %s61 = sphi 0, %s45
      %s65 = sphi 0, %s65
      %s67 = sphi 0, %s65
      %s68 = sphi 0, %s67
      %s82 = sphi 0, %s68
      %s86 = sphi 0, %s86
      %s88 = sphi 0, %s86
      %s89 = sphi 0, %s88
      %s103 = sphi 0, %s89
      %s107 = sphi 0, %s107
      %s109 = sphi 0, %s107
      %s110 = sphi 0, %s109
      %s124 = sphi 0, %s110
      %s128 = sphi 0, %s128
      %s130 = sphi 0, %s128
      %s131 = sphi 0, %s130
      %s145 = sphi 0, %s131
      %s149 = sphi 0, %s149
      %s151 = sphi 0, %s149
      %s152 = sphi 0, %s151
      %s166 = sphi 0, %s152
      %s170 = sphi 0, %s170
      %s172 = sphi 0, %s170
      %s173 = sphi 0, %s172
      %s187 = sphi 0, %s173
      %s191 = sphi 0, %s191
      %s193 = sphi 0, %s191
      %s194 = sphi 0, %s193
      %s208 = sphi 0, %s194
      %s212 = sphi 0, %s212
      %s214 = sphi 0, %s212
      %s215 = sphi 0, %s214
      %s229 = sphi 0, %s215
      %s233 = sphi 0, %s233
      %s235 = sphi 0, %s233
      %s236 = sphi 0, %s235
      %s250 = sphi 0, %s236
      %s254 = sphi 0, %s254
      %s256 = sphi 0, %s254
      %s257 = sphi 0, %s256
      %s271 = sphi 0, %s257
      %s275 = sphi 0, %s275
      %s277 = sphi 0, %s275
      %s278 = sphi 0, %s277
      %s292 = sphi 0, %s278
      %s296 = sphi 0, %s296
      %s298 = sphi 0, %s296
      %s299 = sphi 0, %s298
      %s313 = sphi 0, %s299
      %s317 = sphi 0, %s317
      %s319 = sphi 0, %s317
      %s320 = sphi 0, %s319
      %s334 = sphi 0, %s320
      %s338 = sphi 0, %s338
      %s340 = sphi 0, %s338
      %s341 = sphi 0, %s340
      %s355 = sphi 0, %s341
      %s361 = sphi 0, %s363
      %s364 = sphi 0, %s361
      %s365 = sphi 0, %s364
      %s381 = sphi 0, %s365
    $region4: #{simplenet_forward.1} parent=1 // loop_header_branch
      %34 = sbr.rel (%p32) target = $region8
    $region5: #{simplenet_forward.1} parent=1 // loop_body
      %s36 = ssub.s32 %s31, 1
      %s37 = ssub.s32 %s31, 2
      %s38 = sadd.s32 %s31, 1
      %s39 = ssub.s32 %s31, %s38
      %p40 = scmp.eq.s32.totalorder %s39, 0
      %s42 = sadd.s32 %s41, 1
      %s43 = scalar_select %p40, %s41, %s42
      %p46 = pneg %p40
      %p47 = scmp.eq.s32.totalorder %s31, 1
      %p48 = por %p46, %p47
      %p49 = scmp.ne.s32.totalorder %s41, %s44
      %p50 = scmp.eq.s32.totalorder %s31, 0
      %p51 = por %p49, %p50
      %p52 = scmp.ne.s32.totalorder %s41, %s44
      %p53 = scmp.eq.s32.totalorder %s36, 1
      %p54 = por %p52, %p53
      %p55 = scmp.ne.s32.totalorder %s44, %s45
      %p56 = scmp.eq.s32.totalorder %s36, 0
      %p57 = por %p55, %p56
      %p58 = scmp.ne.s32.totalorder %s44, %s45
      %p59 = scmp.eq.s32.totalorder %s37, 1
      %p60 = por %p58, %p59
      %p62 = scmp.ne.s32.totalorder %s45, %s61
      %p63 = scmp.eq.s32.totalorder %s37, 0
      %p64 = por %p62, %p63
      %s66 = sadd.s32 %s65, 1
      %p69 = scmp.eq.s32.totalorder %s31, 1
      %p70 = scmp.ne.s32.totalorder %s65, %s67
      %p71 = scmp.eq.s32.totalorder %s31, 0
      %p72 = por %p70, %p71
      %p73 = scmp.ne.s32.totalorder %s65, %s67
      %p74 = scmp.eq.s32.totalorder %s36, 1
      %p75 = por %p73, %p74
      %p76 = scmp.ne.s32.totalorder %s67, %s68
      %p77 = scmp.eq.s32.totalorder %s36, 0
      %p78 = por %p76, %p77
      %p79 = scmp.ne.s32.totalorder %s67, %s68
      %p80 = scmp.eq.s32.totalorder %s37, 1
      %p81 = por %p79, %p80
      %p83 = scmp.ne.s32.totalorder %s68, %s82
      %p84 = scmp.eq.s32.totalorder %s37, 0
      %p85 = por %p83, %p84
      %s87 = sadd.s32 %s86, 1
      %p90 = scmp.eq.s32.totalorder %s31, 1
      %p91 = scmp.ne.s32.totalorder %s86, %s88
      %p92 = scmp.eq.s32.totalorder %s31, 0
      %p93 = por %p91, %p92
      %p94 = scmp.ne.s32.totalorder %s86, %s88
      %p95 = scmp.eq.s32.totalorder %s36, 1
      %p96 = por %p94, %p95
      %p97 = scmp.ne.s32.totalorder %s88, %s89
      %p98 = scmp.eq.s32.totalorder %s36, 0
      %p99 = por %p97, %p98
      %p100 = scmp.ne.s32.totalorder %s88, %s89
      %p101 = scmp.eq.s32.totalorder %s37, 1
      %p102 = por %p100, %p101
      %p104 = scmp.ne.s32.totalorder %s89, %s103
      %p105 = scmp.eq.s32.totalorder %s37, 0
      %p106 = por %p104, %p105
      %s108 = sadd.s32 %s107, 1
      %p111 = scmp.eq.s32.totalorder %s31, 1
      %p112 = scmp.ne.s32.totalorder %s107, %s109
      %p113 = scmp.eq.s32.totalorder %s31, 0
      %p114 = por %p112, %p113
      %p115 = scmp.ne.s32.totalorder %s107, %s109
      %p116 = scmp.eq.s32.totalorder %s36, 1
      %p117 = por %p115, %p116
      %p118 = scmp.ne.s32.totalorder %s109, %s110
      %p119 = scmp.eq.s32.totalorder %s36, 0
      %p120 = por %p118, %p119
      %p121 = scmp.ne.s32.totalorder %s109, %s110
      %p122 = scmp.eq.s32.totalorder %s37, 1
      %p123 = por %p121, %p122
      %p125 = scmp.ne.s32.totalorder %s110, %s124
      %p126 = scmp.eq.s32.totalorder %s37, 0
      %p127 = por %p125, %p126
      %s129 = sadd.s32 %s128, 1
      %p132 = scmp.eq.s32.totalorder %s31, 1
      %p133 = scmp.ne.s32.totalorder %s128, %s130
      %p134 = scmp.eq.s32.totalorder %s31, 0
      %p135 = por %p133, %p134
      %p136 = scmp.ne.s32.totalorder %s128, %s130
      %p137 = scmp.eq.s32.totalorder %s36, 1
      %p138 = por %p136, %p137
      %p139 = scmp.ne.s32.totalorder %s130, %s131
      %p140 = scmp.eq.s32.totalorder %s36, 0
      %p141 = por %p139, %p140
      %p142 = scmp.ne.s32.totalorder %s130, %s131
      %p143 = scmp.eq.s32.totalorder %s37, 1
      %p144 = por %p142, %p143
      %p146 = scmp.ne.s32.totalorder %s131, %s145
      %p147 = scmp.eq.s32.totalorder %s37, 0
      %p148 = por %p146, %p147
      %s150 = sadd.s32 %s149, 1
      %p153 = scmp.eq.s32.totalorder %s31, 1
      %p154 = scmp.ne.s32.totalorder %s149, %s151
      %p155 = scmp.eq.s32.totalorder %s31, 0
      %p156 = por %p154, %p155
      %p157 = scmp.ne.s32.totalorder %s149, %s151
      %p158 = scmp.eq.s32.totalorder %s36, 1
      %p159 = por %p157, %p158
      %p160 = scmp.ne.s32.totalorder %s151, %s152
      %p161 = scmp.eq.s32.totalorder %s36, 0
      %p162 = por %p160, %p161
      %p163 = scmp.ne.s32.totalorder %s151, %s152
      %p164 = scmp.eq.s32.totalorder %s37, 1
      %p165 = por %p163, %p164
      %p167 = scmp.ne.s32.totalorder %s152, %s166
      %p168 = scmp.eq.s32.totalorder %s37, 0
      %p169 = por %p167, %p168
      %s171 = sadd.s32 %s170, 1
      %p174 = scmp.eq.s32.totalorder %s31, 1
      %p175 = scmp.ne.s32.totalorder %s170, %s172
      %p176 = scmp.eq.s32.totalorder %s31, 0
      %p177 = por %p175, %p176
      %p178 = scmp.ne.s32.totalorder %s170, %s172
      %p179 = scmp.eq.s32.totalorder %s36, 1
      %p180 = por %p178, %p179
      %p181 = scmp.ne.s32.totalorder %s172, %s173
      %p182 = scmp.eq.s32.totalorder %s36, 0
      %p183 = por %p181, %p182
      %p184 = scmp.ne.s32.totalorder %s172, %s173
      %p185 = scmp.eq.s32.totalorder %s37, 1
      %p186 = por %p184, %p185
      %p188 = scmp.ne.s32.totalorder %s173, %s187
      %p189 = scmp.eq.s32.totalorder %s37, 0
      %p190 = por %p188, %p189
      %s192 = sadd.s32 %s191, 1
      %p195 = scmp.eq.s32.totalorder %s31, 1
      %p196 = scmp.ne.s32.totalorder %s191, %s193
      %p197 = scmp.eq.s32.totalorder %s31, 0
      %p198 = por %p196, %p197
      %p199 = scmp.ne.s32.totalorder %s191, %s193
      %p200 = scmp.eq.s32.totalorder %s36, 1
      %p201 = por %p199, %p200
      %p202 = scmp.ne.s32.totalorder %s193, %s194
      %p203 = scmp.eq.s32.totalorder %s36, 0
      %p204 = por %p202, %p203
      %p205 = scmp.ne.s32.totalorder %s193, %s194
      %p206 = scmp.eq.s32.totalorder %s37, 1
      %p207 = por %p205, %p206
      %p209 = scmp.ne.s32.totalorder %s194, %s208
      %p210 = scmp.eq.s32.totalorder %s37, 0
      %p211 = por %p209, %p210
      %s213 = sadd.s32 %s212, 1
      %p216 = scmp.eq.s32.totalorder %s31, 1
      %p217 = scmp.ne.s32.totalorder %s212, %s214
      %p218 = scmp.eq.s32.totalorder %s31, 0
      %p219 = por %p217, %p218
      %p220 = scmp.ne.s32.totalorder %s212, %s214
      %p221 = scmp.eq.s32.totalorder %s36, 1
      %p222 = por %p220, %p221
      %p223 = scmp.ne.s32.totalorder %s214, %s215
      %p224 = scmp.eq.s32.totalorder %s36, 0
      %p225 = por %p223, %p224
      %p226 = scmp.ne.s32.totalorder %s214, %s215
      %p227 = scmp.eq.s32.totalorder %s37, 1
      %p228 = por %p226, %p227
      %p230 = scmp.ne.s32.totalorder %s215, %s229
      %p231 = scmp.eq.s32.totalorder %s37, 0
      %p232 = por %p230, %p231
      %s234 = sadd.s32 %s233, 1
      %p237 = scmp.eq.s32.totalorder %s31, 1
      %p238 = scmp.ne.s32.totalorder %s233, %s235
      %p239 = scmp.eq.s32.totalorder %s31, 0
      %p240 = por %p238, %p239
      %p241 = scmp.ne.s32.totalorder %s233, %s235
      %p242 = scmp.eq.s32.totalorder %s36, 1
      %p243 = por %p241, %p242
      %p244 = scmp.ne.s32.totalorder %s235, %s236
      %p245 = scmp.eq.s32.totalorder %s36, 0
      %p246 = por %p244, %p245
      %p247 = scmp.ne.s32.totalorder %s235, %s236
      %p248 = scmp.eq.s32.totalorder %s37, 1
      %p249 = por %p247, %p248
      %p251 = scmp.ne.s32.totalorder %s236, %s250
      %p252 = scmp.eq.s32.totalorder %s37, 0
      %p253 = por %p251, %p252
      %s255 = sadd.s32 %s254, 1
      %p258 = scmp.eq.s32.totalorder %s31, 1
      %p259 = scmp.ne.s32.totalorder %s254, %s256
      %p260 = scmp.eq.s32.totalorder %s31, 0
      %p261 = por %p259, %p260
      %p262 = scmp.ne.s32.totalorder %s254, %s256
      %p263 = scmp.eq.s32.totalorder %s36, 1
      %p264 = por %p262, %p263
      %p265 = scmp.ne.s32.totalorder %s256, %s257
      %p266 = scmp.eq.s32.totalorder %s36, 0
      %p267 = por %p265, %p266
      %p268 = scmp.ne.s32.totalorder %s256, %s257
      %p269 = scmp.eq.s32.totalorder %s37, 1
      %p270 = por %p268, %p269
      %p272 = scmp.ne.s32.totalorder %s257, %s271
      %p273 = scmp.eq.s32.totalorder %s37, 0
      %p274 = por %p272, %p273
      %s276 = sadd.s32 %s275, 1
      %p279 = scmp.eq.s32.totalorder %s31, 1
      %p280 = scmp.ne.s32.totalorder %s275, %s277
      %p281 = scmp.eq.s32.totalorder %s31, 0
      %p282 = por %p280, %p281
      %p283 = scmp.ne.s32.totalorder %s275, %s277
      %p284 = scmp.eq.s32.totalorder %s36, 1
      %p285 = por %p283, %p284
      %p286 = scmp.ne.s32.totalorder %s277, %s278
      %p287 = scmp.eq.s32.totalorder %s36, 0
      %p288 = por %p286, %p287
      %p289 = scmp.ne.s32.totalorder %s277, %s278
      %p290 = scmp.eq.s32.totalorder %s37, 1
      %p291 = por %p289, %p290
      %p293 = scmp.ne.s32.totalorder %s278, %s292
      %p294 = scmp.eq.s32.totalorder %s37, 0
      %p295 = por %p293, %p294
      %s297 = sadd.s32 %s296, 1
      %p300 = scmp.eq.s32.totalorder %s31, 1
      %p301 = scmp.ne.s32.totalorder %s296, %s298
      %p302 = scmp.eq.s32.totalorder %s31, 0
      %p303 = por %p301, %p302
      %p304 = scmp.ne.s32.totalorder %s296, %s298
      %p305 = scmp.eq.s32.totalorder %s36, 1
      %p306 = por %p304, %p305
      %p307 = scmp.ne.s32.totalorder %s298, %s299
      %p308 = scmp.eq.s32.totalorder %s36, 0
      %p309 = por %p307, %p308
      %p310 = scmp.ne.s32.totalorder %s298, %s299
      %p311 = scmp.eq.s32.totalorder %s37, 1
      %p312 = por %p310, %p311
      %p314 = scmp.ne.s32.totalorder %s299, %s313
      %p315 = scmp.eq.s32.totalorder %s37, 0
      %p316 = por %p314, %p315
      %s318 = sadd.s32 %s317, 1
      %p321 = scmp.eq.s32.totalorder %s31, 1
      %p322 = scmp.ne.s32.totalorder %s317, %s319
      %p323 = scmp.eq.s32.totalorder %s31, 0
      %p324 = por %p322, %p323
      %p325 = scmp.ne.s32.totalorder %s317, %s319
      %p326 = scmp.eq.s32.totalorder %s36, 1
      %p327 = por %p325, %p326
      %p328 = scmp.ne.s32.totalorder %s319, %s320
      %p329 = scmp.eq.s32.totalorder %s36, 0
      %p330 = por %p328, %p329
      %p331 = scmp.ne.s32.totalorder %s319, %s320
      %p332 = scmp.eq.s32.totalorder %s37, 1
      %p333 = por %p331, %p332
      %p335 = scmp.ne.s32.totalorder %s320, %s334
      %p336 = scmp.eq.s32.totalorder %s37, 0
      %p337 = por %p335, %p336
      %s339 = sadd.s32 %s338, 1
      %p342 = scmp.eq.s32.totalorder %s31, 1
      %p343 = scmp.ne.s32.totalorder %s338, %s340
      %p344 = scmp.eq.s32.totalorder %s31, 0
      %p345 = por %p343, %p344
      %p346 = scmp.ne.s32.totalorder %s338, %s340
      %p347 = scmp.eq.s32.totalorder %s36, 1
      %p348 = por %p346, %p347
      %p349 = scmp.ne.s32.totalorder %s340, %s341
      %p350 = scmp.eq.s32.totalorder %s36, 0
      %p351 = por %p349, %p350
      %p352 = scmp.ne.s32.totalorder %s340, %s341
      %p353 = scmp.eq.s32.totalorder %s37, 1
      %p354 = por %p352, %p353
      %p356 = scmp.ne.s32.totalorder %s341, %s355
      %p357 = scmp.eq.s32.totalorder %s37, 0
      %p358 = por %p356, %p357
      %s359 = ssub.s32 %s31, %s38
      %p360 = scmp.eq.s32.totalorder %s359, 0
      %s362 = sadd.s32 %s361, 1
      %s363 = scalar_select %p360, %s361, %s362
      %p366 = pneg %p360
      %p367 = scmp.eq.s32.totalorder %s31, 1
      %p368 = por %p366, %p367
      %p369 = scmp.ne.s32.totalorder %s361, %s364
      %p370 = scmp.eq.s32.totalorder %s31, 0
      %p371 = por %p369, %p370
      %p372 = scmp.ne.s32.totalorder %s361, %s364
      %p373 = scmp.eq.s32.totalorder %s36, 1
      %p374 = por %p372, %p373
      %p375 = scmp.ne.s32.totalorder %s364, %s365
      %p376 = scmp.eq.s32.totalorder %s36, 0
      %p377 = por %p375, %p376
      %p378 = scmp.ne.s32.totalorder %s364, %s365
      %p379 = scmp.eq.s32.totalorder %s37, 1
      %p380 = por %p378, %p379
      %p382 = scmp.ne.s32.totalorder %s365, %s381
      %p383 = scmp.eq.s32.totalorder %s37, 0
      %p384 = por %p382, %p383
      %p385 = scmp.le.s32.totalorder 1, %s31
      %p386 = scmp.lt.s32.totalorder %s31, 3
      %p387 = pnand %p385, %p386
      %p388 = pneg %p387
      // Predicated region
      $region9: #{simplenet_forward.1} parent=5 // pred_check
        _
      $region10: #{simplenet_forward.1} parent=5 // pred_check_branch
        %390 = sbr.rel (%p387) target = $region12
      $region11: #{simplenet_forward.1} parent=5 // pred_region
        %s391 = ssub.s32 %s31, 1
        // Predicated region
        $region13: #{simplenet_forward.1} parent=11 // pred_check
          %p392 = pneg %p78
        $region14: #{simplenet_forward.1} parent=11 // pred_check_branch
          %394 = sbr.rel (%p392) target = $region16
        $region15: #{simplenet_forward.1} parent=11 // pred_region
          _
        $region16: #{simplenet_forward.1} parent=11 // pred_fallthru
          _
        // Predicated region
        $region17: #{simplenet_forward.1} parent=11 // pred_check
          %p395 = pneg %p99
        $region18: #{simplenet_forward.1} parent=11 // pred_check_branch
          %397 = sbr.rel (%p395) target = $region20
        $region19: #{simplenet_forward.1} parent=11 // pred_region
          %399 = vsyncadd [#allocation7], 0
          %s401 = sshll.u32 %s2, 4
          %s402 = int_to_ptr.hbm [resolvable:$true] %s401
          %s403 = sshll.u32 [#allocation6], 4
          %s404 = int_to_ptr.vmem [resolvable:$true] %s403
          %406 = dma.hbm_to_vmem [thread:$0]  %s402, 32, %s404, [#allocation7]
        $region20: #{simplenet_forward.1} parent=11 // pred_fallthru
          _
        // Predicated region
        $region21: #{simplenet_forward.1} parent=11 // pred_check
          %p407 = pneg %p120
        $region22: #{simplenet_forward.1} parent=11 // pred_check_branch
          %409 = sbr.rel (%p407) target = $region24
        $region23: #{simplenet_forward.1} parent=11 // pred_region
          _
        $region24: #{simplenet_forward.1} parent=11 // pred_fallthru
          _
        // Predicated region
        $region25: #{simplenet_forward.1} parent=11 // pred_check
          %p410 = pneg %p141
        $region26: #{simplenet_forward.1} parent=11 // pred_check_branch
          %412 = sbr.rel (%p410) target = $region28
        $region27: #{simplenet_forward.1} parent=11 // pred_region
          _
        $region28: #{simplenet_forward.1} parent=11 // pred_fallthru
          _
        // Predicated region
        $region29: #{simplenet_forward.1} parent=11 // pred_check
          %p413 = pneg %p162
        $region30: #{simplenet_forward.1} parent=11 // pred_check_branch
          %415 = sbr.rel (%p413) target = $region32
        $region31: #{simplenet_forward.1} parent=11 // pred_region
          %417 = vsyncadd [#allocation7], 0
          %s418 = sshll.u32 %s5, 4
          %s419 = int_to_ptr.hbm [resolvable:$true] %s418
          %s420 = sshll.u32 [#allocation8], 4
          %s421 = int_to_ptr.vmem [resolvable:$true] %s420
          %426 = dma.hbm_to_vmem [thread:$0]  %s419, 9216, %s421, [#allocation7], 256, 256, 16
        $region32: #{simplenet_forward.1} parent=11 // pred_fallthru
          _
        // Predicated region
        $region33: #{simplenet_forward.1} parent=11 // pred_check
          %p427 = pneg %p183
        $region34: #{simplenet_forward.1} parent=11 // pred_check_branch
          %429 = sbr.rel (%p427) target = $region36
        $region35: #{simplenet_forward.1} parent=11 // pred_region
          %431 = vsyncadd [#allocation10], 0
          %s433 = sshll.u32 %s6, 4
          %s434 = int_to_ptr.hbm [resolvable:$true] %s433
          %s435 = sshll.u32 [#allocation9], 4
          %s436 = int_to_ptr.vmem [resolvable:$true] %s435
          %438 = dma.hbm_to_vmem [thread:$0]  %s434, 32, %s436, [#allocation10]
        $region36: #{simplenet_forward.1} parent=11 // pred_fallthru
          _
        // Predicated region
        $region37: #{simplenet_forward.1} parent=11 // pred_check
          %p439 = pneg %p204
        $region38: #{simplenet_forward.1} parent=11 // pred_check_branch
          %441 = sbr.rel (%p439) target = $region40
        $region39: #{simplenet_forward.1} parent=11 // pred_region
          _
        $region40: #{simplenet_forward.1} parent=11 // pred_fallthru
          _
        // Predicated region
        $region41: #{simplenet_forward.1} parent=11 // pred_check
          %p442 = pneg %p225
        $region42: #{simplenet_forward.1} parent=11 // pred_check_branch
          %444 = sbr.rel (%p442) target = $region44
        $region43: #{simplenet_forward.1} parent=11 // pred_region
          _
        $region44: #{simplenet_forward.1} parent=11 // pred_fallthru
          _
        // Predicated region
        $region45: #{simplenet_forward.1} parent=11 // pred_check
          %p445 = pneg %p246
        $region46: #{simplenet_forward.1} parent=11 // pred_check_branch
          %447 = sbr.rel (%p445) target = $region48
        $region47: #{simplenet_forward.1} parent=11 // pred_region
          %449 = vsyncadd [#allocation10], 0
          %s450 = sshll.u32 %s9, 4
          %s451 = int_to_ptr.hbm [resolvable:$true] %s450
          %s452 = sshll.u32 [#allocation11], 4
          %s453 = int_to_ptr.vmem [resolvable:$true] %s452
          %458 = dma.hbm_to_vmem [thread:$0]  %s451, 12288, %s453, [#allocation10], 128, 128, 8
        $region48: #{simplenet_forward.1} parent=11 // pred_fallthru
          _
        // Predicated region
        $region49: #{simplenet_forward.1} parent=11 // pred_check
          %p459 = pneg %p267
        $region50: #{simplenet_forward.1} parent=11 // pred_check_branch
          %461 = sbr.rel (%p459) target = $region52
        $region51: #{simplenet_forward.1} parent=11 // pred_region
          %463 = vsyncadd [#allocation13], 0
          %s465 = sshll.u32 %s10, 4
          %s466 = int_to_ptr.hbm [resolvable:$true] %s465
          %s467 = sshll.u32 [#allocation12], 4
          %s468 = int_to_ptr.vmem [resolvable:$true] %s467
          %470 = dma.hbm_to_vmem [thread:$0]  %s466, 16, %s468, [#allocation13]
        $region52: #{simplenet_forward.1} parent=11 // pred_fallthru
          _
        // Predicated region
        $region53: #{simplenet_forward.1} parent=11 // pred_check
          %p471 = pneg %p288
        $region54: #{simplenet_forward.1} parent=11 // pred_check_branch
          %473 = sbr.rel (%p471) target = $region56
        $region55: #{simplenet_forward.1} parent=11 // pred_region
          %475 = vsyncadd [#allocation13], 0
          %s476 = sshll.u32 %s11, 4
          %s477 = int_to_ptr.hbm [resolvable:$true] %s476
          %s478 = sshll.u32 [#allocation14], 4
          %s479 = int_to_ptr.vmem [resolvable:$true] %s478
          %484 = dma.hbm_to_vmem [thread:$0]  %s477, 2048, %s479, [#allocation13], 128, 128, 8
        $region56: #{simplenet_forward.1} parent=11 // pred_fallthru
          _
        // Predicated region
        $region57: #{simplenet_forward.1} parent=11 // pred_check
          %p485 = pneg %p309
        $region58: #{simplenet_forward.1} parent=11 // pred_check_branch
          %487 = sbr.rel (%p485) target = $region60
        $region59: #{simplenet_forward.1} parent=11 // pred_region
          %489 = vsyncadd [#allocation16], 0
          %s491 = sshll.u32 %s12, 4
          %s492 = int_to_ptr.hbm [resolvable:$true] %s491
          %s493 = sshll.u32 [#allocation15], 4
          %s494 = int_to_ptr.vmem [resolvable:$true] %s493
          %496 = dma.hbm_to_vmem [thread:$0]  %s492, 16, %s494, [#allocation16]
        $region60: #{simplenet_forward.1} parent=11 // pred_fallthru
          _
        // Predicated region
        $region61: #{simplenet_forward.1} parent=11 // pred_check
          %p497 = pneg %p330
        $region62: #{simplenet_forward.1} parent=11 // pred_check_branch
          %499 = sbr.rel (%p497) target = $region64
        $region63: #{simplenet_forward.1} parent=11 // pred_region
          %501 = vsyncadd [#allocation16], 0
          %s502 = sshll.u32 %s13, 4
          %s503 = int_to_ptr.hbm [resolvable:$true] %s502
          %s504 = sshll.u32 [#allocation17], 4
          %s505 = int_to_ptr.vmem [resolvable:$true] %s504
          %510 = dma.hbm_to_vmem [thread:$0]  %s503, 2048, %s505, [#allocation16], 128, 128, 8
        $region64: #{simplenet_forward.1} parent=11 // pred_fallthru
          _
        // Predicated region
        $region65: #{simplenet_forward.1} parent=11 // pred_check
          %p511 = pneg %p351
        $region66: #{simplenet_forward.1} parent=11 // pred_check_branch
          %513 = sbr.rel (%p511) target = $region68
        $region67: #{simplenet_forward.1} parent=11 // pred_region
          _
        $region68: #{simplenet_forward.1} parent=11 // pred_fallthru
          _
      $region12: #{simplenet_forward.1} parent=5 // pred_fallthru
        _
      %p514 = scmp.lt.s32.totalorder %s31, 2
      // Predicated region
      $region69: #{simplenet_forward.1} parent=5 // pred_check
        %p515 = pneg %p514
      $region70: #{simplenet_forward.1} parent=5 // pred_check_branch
        %517 = sbr.rel (%p515) target = $region72
      $region71: #{simplenet_forward.1} parent=5 // pred_region
        // Predicated region
        $region73: #{simplenet_forward.1} parent=71 // pred_check
          %p518 = pneg %p51
        $region74: #{simplenet_forward.1} parent=71 // pred_check_branch
          %520 = sbr.rel (%p518) target = $region76
        $region75: #{simplenet_forward.1} parent=71 // pred_region
          %s521 = sand.u32 %s41, 1
          %s522 = scalar_lea.sflag [#allocation4], %s521
          %s523 = sand.u32 %s41, 1
          %s524 = smul.addr %s523, 32
          %s525 = scalar_lea.vmem [#allocation3], %s524
          %527 = vsyncadd %s522, 0
          %s528 = smul.addr %s31, 4
          %s529 = smul.addr %s528, 8
          %s530 = scalar_lea.hbm %s0, %s529
          %s531 = sshll.u32 %s530, 4
          %s532 = int_to_ptr.hbm [resolvable:$true] %s531
          %s533 = sshll.u32 %s525, 4
          %s534 = int_to_ptr.vmem [resolvable:$true] %s533
          %539 = dma.hbm_to_vmem [thread:$0]  %s532, 512, %s534, %s522, 128, 128, 8
        $region76: #{simplenet_forward.1} parent=71 // pred_fallthru
          _
      $region72: #{simplenet_forward.1} parent=5 // pred_fallthru
        _
      %p540 = scmp.le.s32.totalorder 1, %s31
      %p541 = scmp.lt.s32.totalorder %s31, 3
      %p542 = pnand %p540, %p541
      %p543 = pneg %p542
      // Predicated region
      $region77: #{simplenet_forward.1} parent=5 // pred_check
        _
      $region78: #{simplenet_forward.1} parent=5 // pred_check_branch
        %545 = sbr.rel (%p542) target = $region80
      $region79: #{simplenet_forward.1} parent=5 // pred_region
        %s546 = ssub.s32 %s31, 1
        %s547 = sand.u32 %s44, 1
        %s548 = scalar_lea.sflag [#allocation4], %s547
        %s549 = sand.u32 %s44, 1
        %s550 = smul.addr %s549, 32
        %s551 = scalar_lea.vmem [#allocation3], %s550
        // Predicated region
        $region81: #{simplenet_forward.1} parent=79 // pred_check
          %p552 = pneg %p57
        $region82: #{simplenet_forward.1} parent=79 // pred_check_branch
          %554 = sbr.rel (%p552) target = $region84
        $region83: #{simplenet_forward.1} parent=79 // pred_region
          %556 = dma.done %s548, 512
        $region84: #{simplenet_forward.1} parent=79 // pred_fallthru
          _
        // Predicated region
        $region85: #{simplenet_forward.1} parent=79 // pred_check
          %p557 = pneg %p99
        $region86: #{simplenet_forward.1} parent=79 // pred_check_branch
          %559 = sbr.rel (%p557) target = $region88
        $region87: #{simplenet_forward.1} parent=79 // pred_region
          %561 = dma.done [#allocation7], 32
        $region88: #{simplenet_forward.1} parent=79 // pred_fallthru
          _
        // Predicated region
        $region89: #{simplenet_forward.1} parent=79 // pred_check
          %p562 = pneg %p162
        $region90: #{simplenet_forward.1} parent=79 // pred_check_branch
          %564 = sbr.rel (%p562) target = $region92
        $region91: #{simplenet_forward.1} parent=79 // pred_region
          %566 = dma.done [#allocation7], 9216
        $region92: #{simplenet_forward.1} parent=79 // pred_fallthru
          _
        // Predicated region
        $region93: #{simplenet_forward.1} parent=79 // pred_check
          %p567 = pneg %p183
        $region94: #{simplenet_forward.1} parent=79 // pred_check_branch
          %569 = sbr.rel (%p567) target = $region96
        $region95: #{simplenet_forward.1} parent=79 // pred_region
          %571 = dma.done [#allocation10], 32
        $region96: #{simplenet_forward.1} parent=79 // pred_fallthru
          _
        // Predicated region
        $region97: #{simplenet_forward.1} parent=79 // pred_check
          %p572 = pneg %p246
        $region98: #{simplenet_forward.1} parent=79 // pred_check_branch
          %574 = sbr.rel (%p572) target = $region100
        $region99: #{simplenet_forward.1} parent=79 // pred_region
          %576 = dma.done [#allocation10], 12288
        $region100: #{simplenet_forward.1} parent=79 // pred_fallthru
          _
        // Predicated region
        $region101: #{simplenet_forward.1} parent=79 // pred_check
          %p577 = pneg %p267
        $region102: #{simplenet_forward.1} parent=79 // pred_check_branch
          %579 = sbr.rel (%p577) target = $region104
        $region103: #{simplenet_forward.1} parent=79 // pred_region
          %581 = dma.done [#allocation13], 16
        $region104: #{simplenet_forward.1} parent=79 // pred_fallthru
          _
        // Predicated region
        $region105: #{simplenet_forward.1} parent=79 // pred_check
          %p582 = pneg %p288
        $region106: #{simplenet_forward.1} parent=79 // pred_check_branch
          %584 = sbr.rel (%p582) target = $region108
        $region107: #{simplenet_forward.1} parent=79 // pred_region
          %586 = dma.done [#allocation13], 2048
        $region108: #{simplenet_forward.1} parent=79 // pred_fallthru
          _
        // Predicated region
        $region109: #{simplenet_forward.1} parent=79 // pred_check
          %p587 = pneg %p309
        $region110: #{simplenet_forward.1} parent=79 // pred_check_branch
          %589 = sbr.rel (%p587) target = $region112
        $region111: #{simplenet_forward.1} parent=79 // pred_region
          %591 = dma.done [#allocation16], 16
        $region112: #{simplenet_forward.1} parent=79 // pred_fallthru
          _
        // Predicated region
        $region113: #{simplenet_forward.1} parent=79 // pred_check
          %p592 = pneg %p330
        $region114: #{simplenet_forward.1} parent=79 // pred_check_branch
          %594 = sbr.rel (%p592) target = $region116
        $region115: #{simplenet_forward.1} parent=79 // pred_region
          %596 = dma.done [#allocation16], 2048
        $region116: #{simplenet_forward.1} parent=79 // pred_fallthru
          _
        %s597 = sand.u32 %s44, 1
        %s598 = scalar_lea.sflag [#allocation4], %s597
        %s599 = sand.u32 %s44, 1
        %s600 = smul.addr %s599, 32
        %s601 = scalar_lea.vmem [#allocation3], %s600
        %p602 = pneg %p57
        %p603 = pneg %p54
        %p604 = pneg %p78
        %p605 = pneg %p75
        %p606 = pneg %p99
        %p607 = pneg %p96
        %p608 = pneg %p120
        %p609 = pneg %p117
        %p610 = pneg %p141
        %p611 = pneg %p138
        %p612 = pneg %p162
        %p613 = pneg %p159
        %p614 = pneg %p183
        %p615 = pneg %p180
        %p616 = pneg %p204
        %p617 = pneg %p201
        %p618 = pneg %p225
        %p619 = pneg %p222
        %p620 = pneg %p246
        %p621 = pneg %p243
        %p622 = pneg %p267
        %p623 = pneg %p264
        %p624 = pneg %p288
        %p625 = pneg %p285
        %p626 = pneg %p309
        %p627 = pneg %p306
        %p628 = pneg %p330
        %p629 = pneg %p327
        %p630 = pneg %p351
        %p631 = pneg %p348
        %p632 = pneg %p377
        %p633 = pneg %p374
        %s634 = sand.u32 %s364, 1
        %s635 = scalar_lea.sflag [#allocation5], %s634
        %s636 = sand.u32 %s364, 1
        %s637 = scalar_lea.vmem [#allocation18], %s636
        %v638 = vlaneseq
        %vm639 = vcmp.ge.s32.totalorder %v638, 0
        %vm640 = vcmp.lt.s32.totalorder %v638, 768
        %vm641 = vmand %vm639, %vm640
        %642 = vst.msk [vmem:[#allocation2] sm:$0x3f] %vm641, 0.0
        %v643 = vld [vmem:[%s551] sm:$0xff]
        %v644 = vld [vmem:[%s551 + $0x8] sm:$0xff]
        %v645 = vld [vmem:[%s551 + $0x10] sm:$0xff]
        %v646 = vld [vmem:[%s551 + $0x18] sm:$0xff]
        %v647 = vld [vmem:[%s1] sm:$0xff]
        %v648 = vld [vmem:[%s1 + $0x8] sm:$0xff]
        %v649 = vld [vmem:[%s1 + $0x10] sm:$0xff]
        %v650 = vld [vmem:[%s1 + $0x18] sm:$0xff]
        %v651 = vld [vmem:[%s1 + $0x20] sm:$0xff]
        %v652 = vld [vmem:[%s1 + $0x28] sm:$0xff]
        %v653 = vld [vmem:[%s1 + $0x30] sm:$0xff]
        %v654 = vld [vmem:[%s1 + $0x38] sm:$0xff]
        %s655 = scalar_lea.vmem %s1, 64
        %v656 = vld [vmem:[%s655] sm:$0xff]
        %v657 = vld [vmem:[%s655 + $0x8] sm:$0xff]
        %v658 = vld [vmem:[%s655 + $0x10] sm:$0xff]
        %v659 = vld [vmem:[%s655 + $0x18] sm:$0xff]
        %v660 = vld [vmem:[%s655 + $0x20] sm:$0xff]
        %v661 = vld [vmem:[%s655 + $0x28] sm:$0xff]
        %v662 = vld [vmem:[%s655 + $0x30] sm:$0xff]
        %v663 = vld [vmem:[%s655 + $0x38] sm:$0xff]
        %vm668 = vcmask 1046528
        %v669 = vrot.slane %v643, 1
        %v670 = vrot.slane %v644, 1
        %v671 = vsel %vm668, %v669, %v670
        %v672 = vrot.slane %v645, 1
        %v673 = vsel %vm668, %v670, %v672
        %v674 = vrot.slane %v646, 1
        %v675 = vsel %vm668, %v672, %v674
        %vm676 = vcmask 261120
        %v677 = vsel %vm676, %v671, 0
        %v679 = vsel %vm676, %v673, 0
        %v681 = vsel %vm676, %v675, 0
        %v683 = vsel %vm676, %v674, 0
        %685 = vmatpush.msra.mxu0 0.0
        %686 = vmatpush.msra.mxu0 0.0
        %687 = vmatpush.msra.mxu0 0.0
        %688 = vmatpush.msra.mxu0 0.0
        %689 = vmatpush.msra.mxu0 0.0
        %690 = vmatpush.msra.mxu0 0.0
        %691 = vmatpush.msra.mxu0 0.0
        %692 = vmatpush.msra.mxu0 0.0
        %693 = vmatpush.msra.mxu0 0.0
        %694 = vmatpush.msra.mxu0 0.0
        %695 = vmatpush.msra.mxu0 0.0
        %696 = vmatpush.msra.mxu0 0.0
        %697 = vmatpush.msra.mxu0 %v662
        %698 = vmatpush.msra.mxu0 %v660
        %699 = vmatpush.msra.mxu0 %v658
        %700 = vmatpush.msra.mxu0 %v656
        %701 = vmatmul.f32.gmra.mxu0 %v677
        %v702 = vpop.f32.mrf.mxu0
        %v703 = vadd.f32 0.0, %v702
        %704 = vmatmul.f32.gmra.mxu0 %v679
        %v705 = vpop.f32.mrf.mxu0
        %v706 = vadd.f32 0.0, %v705
        %707 = vmatmul.f32.gmra.mxu0 %v681
        %v708 = vpop.f32.mrf.mxu0
        %v709 = vadd.f32 0.0, %v708
        %710 = vmatmul.f32.gmra.mxu0 %v683
        %v711 = vpop.f32.mrf.mxu0
        %v712 = vadd.f32 0.0, %v711
        %713 = vdwg.mxu0
        %714 = vmatpush.msra.mxu0 0.0
        %715 = vmatpush.msra.mxu0 0.0
        %716 = vmatpush.msra.mxu0 0.0
        %717 = vmatpush.msra.mxu0 0.0
        %718 = vmatpush.msra.mxu0 0.0
        %719 = vmatpush.msra.mxu0 0.0
        %720 = vmatpush.msra.mxu0 0.0
        %721 = vmatpush.msra.mxu0 0.0
        %722 = vmatpush.msra.mxu0 0.0
        %723 = vmatpush.msra.mxu0 0.0
        %724 = vmatpush.msra.mxu0 0.0
        %725 = vmatpush.msra.mxu0 0.0
        %726 = vmatpush.msra.mxu0 %v663
        %727 = vmatpush.msra.mxu0 %v661
        %728 = vmatpush.msra.mxu0 %v659
        %729 = vmatpush.msra.mxu0 %v657
        %730 = vmatmul.f32.gmra.mxu0 %v677
        %v731 = vpop.f32.mrf.mxu0
        %v732 = vadd.f32 0.0, %v731
        %733 = vmatmul.f32.gmra.mxu0 %v679
        %v734 = vpop.f32.mrf.mxu0
        %v735 = vadd.f32 0.0, %v734
        %736 = vmatmul.f32.gmra.mxu0 %v681
        %v737 = vpop.f32.mrf.mxu0
        %v738 = vadd.f32 0.0, %v737
        %739 = vmatmul.f32.gmra.mxu0 %v683
        %v740 = vpop.f32.mrf.mxu0
        %v741 = vadd.f32 0.0, %v740
        %742 = vdwg.mxu0
        %v743 = vsel %vm676, %v643, 0
        %v745 = vsel %vm676, %v644, 0
        %v747 = vsel %vm676, %v645, 0
        %v749 = vsel %vm676, %v646, 0
        %751 = vmatpush.msra.mxu0 0.0
        %752 = vmatpush.msra.mxu0 0.0
        %753 = vmatpush.msra.mxu0 0.0
        %754 = vmatpush.msra.mxu0 0.0
        %755 = vmatpush.msra.mxu0 0.0
        %756 = vmatpush.msra.mxu0 0.0
        %757 = vmatpush.msra.mxu0 0.0
        %758 = vmatpush.msra.mxu0 0.0
        %759 = vmatpush.msra.mxu0 0.0
        %760 = vmatpush.msra.mxu0 0.0
        %761 = vmatpush.msra.mxu0 0.0
        %762 = vmatpush.msra.mxu0 0.0
        %763 = vmatpush.msra.mxu0 %v653
        %764 = vmatpush.msra.mxu0 %v651
        %765 = vmatpush.msra.mxu0 %v649
        %766 = vmatpush.msra.mxu0 %v647
        %767 = vmatmul.f32.gmra.mxu0 %v743
        %v768 = vpop.f32.mrf.mxu0
        %v769 = vadd.f32 %v703, %v768
        %770 = vmatmul.f32.gmra.mxu0 %v745
        %v771 = vpop.f32.mrf.mxu0
        %v772 = vadd.f32 %v706, %v771
        %773 = vmatmul.f32.gmra.mxu0 %v747
        %v774 = vpop.f32.mrf.mxu0
        %v775 = vadd.f32 %v709, %v774
        %776 = vmatmul.f32.gmra.mxu0 %v749
        %v777 = vpop.f32.mrf.mxu0
        %v778 = vadd.f32 %v712, %v777
        %779 = vdwg.mxu0
        %780 = vmatpush.msra.mxu0 0.0
        %781 = vmatpush.msra.mxu0 0.0
        %782 = vmatpush.msra.mxu0 0.0
        %783 = vmatpush.msra.mxu0 0.0
        %784 = vmatpush.msra.mxu0 0.0
        %785 = vmatpush.msra.mxu0 0.0
        %786 = vmatpush.msra.mxu0 0.0
        %787 = vmatpush.msra.mxu0 0.0
        %788 = vmatpush.msra.mxu0 0.0
        %789 = vmatpush.msra.mxu0 0.0
        %790 = vmatpush.msra.mxu0 0.0
        %791 = vmatpush.msra.mxu0 0.0
        %792 = vmatpush.msra.mxu0 %v654
        %793 = vmatpush.msra.mxu0 %v652
        %794 = vmatpush.msra.mxu0 %v650
        %795 = vmatpush.msra.mxu0 %v648
        %796 = vmatmul.f32.gmra.mxu0 %v743
        %v797 = vpop.f32.mrf.mxu0
        %v798 = vadd.f32 %v732, %v797
        %799 = vmatmul.f32.gmra.mxu0 %v745
        %v800 = vpop.f32.mrf.mxu0
        %v801 = vadd.f32 %v735, %v800
        %802 = vmatmul.f32.gmra.mxu0 %v747
        %v803 = vpop.f32.mrf.mxu0
        %v804 = vadd.f32 %v738, %v803
        %805 = vmatmul.f32.gmra.mxu0 %v749
        %v806 = vpop.f32.mrf.mxu0
        %v807 = vadd.f32 %v741, %v806
        %808 = vdwg.mxu0
        %s809 = scalar_lea.vmem %s1, 128
        %v810 = vld [vmem:[%s809] sm:$0xff]
        %v811 = vld [vmem:[%s809 + $0x8] sm:$0xff]
        %v812 = vld [vmem:[%s809 + $0x10] sm:$0xff]
        %v813 = vld [vmem:[%s809 + $0x18] sm:$0xff]
        %v814 = vld [vmem:[%s809 + $0x20] sm:$0xff]
        %v815 = vld [vmem:[%s809 + $0x28] sm:$0xff]
        %v816 = vld [vmem:[%s809 + $0x30] sm:$0xff]
        %v817 = vld [vmem:[%s809 + $0x38] sm:$0xff]
        %vm818 = vcmask 1045504
        %v819 = vrot.slane %v643, 2
        %v820 = vrot.slane %v644, 2
        %v821 = vsel %vm818, %v819, %v820
        %v822 = vrot.slane %v645, 2
        %v823 = vsel %vm818, %v820, %v822
        %v824 = vrot.slane %v646, 2
        %v825 = vsel %vm818, %v822, %v824
        %v826 = vsel %vm676, %v821, 0
        %v828 = vsel %vm676, %v823, 0
        %v830 = vsel %vm676, %v825, 0
        %v832 = vsel %vm676, %v824, 0
        %834 = vmatpush.msra.mxu0 0.0
        %835 = vmatpush.msra.mxu0 0.0
        %836 = vmatpush.msra.mxu0 0.0
        %837 = vmatpush.msra.mxu0 0.0
        %838 = vmatpush.msra.mxu0 0.0
        %839 = vmatpush.msra.mxu0 0.0
        %840 = vmatpush.msra.mxu0 0.0
        %841 = vmatpush.msra.mxu0 0.0
        %842 = vmatpush.msra.mxu0 0.0
        %843 = vmatpush.msra.mxu0 0.0
        %844 = vmatpush.msra.mxu0 0.0
        %845 = vmatpush.msra.mxu0 0.0
        %846 = vmatpush.msra.mxu0 %v816
        %847 = vmatpush.msra.mxu0 %v814
        %848 = vmatpush.msra.mxu0 %v812
        %849 = vmatpush.msra.mxu0 %v810
        %850 = vmatmul.f32.gmra.mxu0 %v826
        %v851 = vpop.f32.mrf.mxu0
        %v852 = vadd.f32 0.0, %v851
        %853 = vmatmul.f32.gmra.mxu0 %v828
        %v854 = vpop.f32.mrf.mxu0
        %v855 = vadd.f32 0.0, %v854
        %856 = vmatmul.f32.gmra.mxu0 %v830
        %v857 = vpop.f32.mrf.mxu0
        %v858 = vadd.f32 0.0, %v857
        %859 = vmatmul.f32.gmra.mxu0 %v832
        %v860 = vpop.f32.mrf.mxu0
        %v861 = vadd.f32 0.0, %v860
        %862 = vdwg.mxu0
        %863 = vmatpush.msra.mxu0 0.0
        %864 = vmatpush.msra.mxu0 0.0
        %865 = vmatpush.msra.mxu0 0.0
        %866 = vmatpush.msra.mxu0 0.0
        %867 = vmatpush.msra.mxu0 0.0
        %868 = vmatpush.msra.mxu0 0.0
        %869 = vmatpush.msra.mxu0 0.0
        %870 = vmatpush.msra.mxu0 0.0
        %871 = vmatpush.msra.mxu0 0.0
        %872 = vmatpush.msra.mxu0 0.0
        %873 = vmatpush.msra.mxu0 0.0
        %874 = vmatpush.msra.mxu0 0.0
        %875 = vmatpush.msra.mxu0 %v817
        %876 = vmatpush.msra.mxu0 %v815
        %877 = vmatpush.msra.mxu0 %v813
        %878 = vmatpush.msra.mxu0 %v811
        %879 = vmatmul.f32.gmra.mxu0 %v826
        %v880 = vpop.f32.mrf.mxu0
        %v881 = vadd.f32 0.0, %v880
        %882 = vmatmul.f32.gmra.mxu0 %v828
        %v883 = vpop.f32.mrf.mxu0
        %v884 = vadd.f32 0.0, %v883
        %885 = vmatmul.f32.gmra.mxu0 %v830
        %v886 = vpop.f32.mrf.mxu0
        %v887 = vadd.f32 0.0, %v886
        %888 = vmatmul.f32.gmra.mxu0 %v832
        %v889 = vpop.f32.mrf.mxu0
        %v890 = vadd.f32 0.0, %v889
        %891 = vdwg.mxu0
        %v892 = vadd.f32 %v769, %v852
        %v893 = vadd.f32 %v798, %v881
        %v894 = vadd.f32 %v772, %v855
        %v895 = vadd.f32 %v801, %v884
        %v896 = vadd.f32 %v775, %v858
        %v897 = vadd.f32 %v804, %v887
        %v898 = vadd.f32 %v778, %v861
        %v899 = vadd.f32 %v807, %v890
        %v900 = vld [vmem:[#allocation6] sm:$0x3]
        %v902 = vperm.slane %v900, 0
        %v903 = vperm.slane %v900, 1
        %v906 = vadd.f32 %v892, %v902
        %v907 = vadd.f32 %v893, %v903
        %v908 = vadd.f32 %v894, %v902
        %v909 = vadd.f32 %v895, %v903
        %v910 = vadd.f32 %v896, %v902
        %v911 = vadd.f32 %v897, %v903
        %v912 = vadd.f32 %v898, %v902
        %v913 = vadd.f32 %v899, %v903
        %v914 = vmax.f32 %v906, 0.0
        %v915 = vmax.f32 %v907, 0.0
        %v916 = vmax.f32 %v908, 0.0
        %v917 = vmax.f32 %v909, 0.0
        %v918 = vmax.f32 %v910, 0.0
        %v919 = vmax.f32 %v911, 0.0
        %v920 = vmax.f32 %v912, 0.0
        %v921 = vmax.f32 %v913, 0.0
        %v930 = vrot.slane %v914, 1
        %v931 = vrot.slane %v916, 1
        %v932 = vsel %vm668, %v930, %v931
        %v933 = vrot.slane %v915, 1
        %v934 = vrot.slane %v917, 1
        %v935 = vsel %vm668, %v933, %v934
        %v936 = vrot.slane %v918, 1
        %v937 = vsel %vm668, %v931, %v936
        %v938 = vrot.slane %v919, 1
        %v939 = vsel %vm668, %v934, %v938
        %v940 = vrot.slane %v920, 1
        %v941 = vsel %vm668, %v936, %v940
        %v942 = vrot.slane %v921, 1
        %v943 = vsel %vm668, %v938, %v942
        %v952 = vmax.f32 %v914, %v932
        %v953 = vmax.f32 %v915, %v935
        %v954 = vmax.f32 %v916, %v937
        %v955 = vmax.f32 %v917, %v939
        %v956 = vmax.f32 %v918, %v941
        %v957 = vmax.f32 %v919, %v943
        %v958 = vmax.f32 %v920, %v940
        %v959 = vmax.f32 %v921, %v942
        %968 = vrot.lane.b32.xlu0 %v952, 127
        %v969 = vpop.permute.xlu0 %968
        %970 = vrot.lane.b32.xlu0 %v953, 127
        %v971 = vpop.permute.xlu0 %970
        %972 = vrot.lane.b32.xlu0 %v954, 127
        %v973 = vpop.permute.xlu0 %972
        %974 = vrot.lane.b32.xlu0 %v955, 127
        %v975 = vpop.permute.xlu0 %974
        %976 = vrot.lane.b32.xlu0 %v956, 127
        %v977 = vpop.permute.xlu0 %976
        %978 = vrot.lane.b32.xlu0 %v957, 127
        %v979 = vpop.permute.xlu0 %978
        %980 = vrot.lane.b32.xlu0 %v958, 127
        %v981 = vpop.permute.xlu0 %980
        %982 = vrot.lane.b32.xlu0 %v959, 127
        %v983 = vpop.permute.xlu0 %982
        %vm984 = vcmask 1039360
        %v985 = vsel %vm984, %v969, %v971
        %v986 = vsel %vm984, %v973, %v975
        %v987 = vsel %vm984, %v977, %v979
        %v988 = vsel %vm984, %v981, %v983
        %v997 = vmax.f32 %v952, %v985
        %v998 = vmax.f32 %v953, %v971
        %v999 = vmax.f32 %v954, %v986
        %v1000 = vmax.f32 %v955, %v975
        %v1001 = vmax.f32 %v956, %v987
        %v1002 = vmax.f32 %v957, %v979
        %v1003 = vmax.f32 %v958, %v988
        %v1004 = vmax.f32 %v959, %v983
        %v1005 = vld [vmem:[%s4] sm:$0xff]
        %v1006 = vld [vmem:[%s4 + $0x8] sm:$0x7f]
        %v1007 = vld [vmem:[%s3] sm:$0xff]
        %v1008 = vld [vmem:[%s3 + $0x8] sm:$0xff]
        %v1009 = vld [vmem:[%s3 + $0x10] sm:$0xff]
        %v1010 = vld [vmem:[%s3 + $0x18] sm:$0xff]
        %v1011 = vld [vmem:[%s3 + $0x20] sm:$0xff]
        %v1012 = vld [vmem:[%s3 + $0x28] sm:$0xff]
        %v1013 = vld [vmem:[%s3 + $0x30] sm:$0xff]
        %v1014 = vld [vmem:[%s3 + $0x38] sm:$0xff]
        %v1015 = vld [vmem:[%s3 + $0x40] sm:$0xff]
        %v1016 = vld [vmem:[%s3 + $0x48] sm:$0xff]
        %v1017 = vld [vmem:[%s3 + $0x50] sm:$0xff]
        %v1018 = vld [vmem:[%s3 + $0x58] sm:$0xff]
        %v1019 = vld [vmem:[%s3 + $0x60] sm:$0xff]
        %v1020 = vld [vmem:[%s3 + $0x68] sm:$0xff]
        %v1021 = vld [vmem:[%s3 + $0x70] sm:$0xff]
        %v1022 = vld [vmem:[%s3 + $0x78] sm:$0xff]
        %v1023 = vld [vmem:[%s3 + $0x80] sm:$0xff]
        %v1024 = vld [vmem:[%s3 + $0x88] sm:$0xff]
        %v1025 = vld [vmem:[%s3 + $0x90] sm:$0xff]
        %v1026 = vld [vmem:[%s3 + $0x98] sm:$0xff]
        %v1027 = vld [vmem:[%s3 + $0xa0] sm:$0xff]
        %v1028 = vld [vmem:[%s3 + $0xa8] sm:$0xff]
        %v1029 = vld [vmem:[%s3 + $0xb0] sm:$0x7]
        %vm1030 = vcmask 416768
        %v1032 = vsel %vm1030, %v998, 0
        %v1035 = vsel %vm1030, %v1000, 0
        %v1038 = vsel %vm1030, %v1002, 0
        %v1041 = vsel %vm1030, %v1004, 0
        %vm1043 = vcmask 1042432
        %v1045 = vsel %vm1043, %v1029, 0
        %1047 = vmatpush.msra.mxu0 %v1022
        %1048 = vmatpush.msra.mxu0 %v1021
        %1049 = vmatpush.msra.mxu0 %v1020
        %1050 = vmatpush.msra.mxu0 %v1019
        %1051 = vmatpush.msra.mxu0 %v1018
        %1052 = vmatpush.msra.mxu0 %v1017
        %1053 = vmatpush.msra.mxu0 %v1016
        %1054 = vmatpush.msra.mxu0 %v1015
        %1055 = vmatpush.msra.mxu0 %v1014
        %1056 = vmatpush.msra.mxu0 %v1013
        %1057 = vmatpush.msra.mxu0 %v1012
        %1058 = vmatpush.msra.mxu0 %v1011
        %1059 = vmatpush.msra.mxu0 %v1010
        %1060 = vmatpush.msra.mxu0 %v1009
        %1061 = vmatpush.msra.mxu0 %v1008
        %1062 = vmatpush.msra.mxu0 %v1007
        %1063 = vmatmul.f32.gmra.mxu0 %v997
        %v1064 = vpop.f32.mrf.mxu0
        %v1065 = vadd.f32 0.0, %v1064
        %1066 = vmatmul.f32.gmra.mxu0 %v999
        %v1067 = vpop.f32.mrf.mxu0
        %v1068 = vadd.f32 0.0, %v1067
        %1069 = vmatmul.f32.gmra.mxu0 %v1001
        %v1070 = vpop.f32.mrf.mxu0
        %v1071 = vadd.f32 0.0, %v1070
        %1072 = vmatmul.f32.gmra.mxu0 %v1003
        %v1073 = vpop.f32.mrf.mxu0
        %v1074 = vadd.f32 0.0, %v1073
        %1075 = vdwg.mxu0
        %1076 = vmatpush.msra.mxu0 0.0
        %1077 = vmatpush.msra.mxu0 0.0
        %1078 = vmatpush.msra.mxu0 0.0
        %1079 = vmatpush.msra.mxu0 0.0
        %1080 = vmatpush.msra.mxu0 0.0
        %1081 = vmatpush.msra.mxu0 0.0
        %1082 = vmatpush.msra.mxu0 0.0
        %1083 = vmatpush.msra.mxu0 0.0
        %1084 = vmatpush.msra.mxu0 0.0
        %1085 = vmatpush.msra.mxu0 %v1045
        %1086 = vmatpush.msra.mxu0 %v1028
        %1087 = vmatpush.msra.mxu0 %v1027
        %1088 = vmatpush.msra.mxu0 %v1026
        %1089 = vmatpush.msra.mxu0 %v1025
        %1090 = vmatpush.msra.mxu0 %v1024
        %1091 = vmatpush.msra.mxu0 %v1023
        %1092 = vmatmul.f32.gmra.mxu0 %v1032
        %v1093 = vpop.f32.mrf.mxu0
        %v1094 = vadd.f32 %v1065, %v1093
        %1095 = vmatmul.f32.gmra.mxu0 %v1035
        %v1096 = vpop.f32.mrf.mxu0
        %v1097 = vadd.f32 %v1068, %v1096
        %1098 = vmatmul.f32.gmra.mxu0 %v1038
        %v1099 = vpop.f32.mrf.mxu0
        %v1100 = vadd.f32 %v1071, %v1099
        %1101 = vmatmul.f32.gmra.mxu0 %v1041
        %v1102 = vpop.f32.mrf.mxu0
        %v1103 = vadd.f32 %v1074, %v1102
        %1104 = vdwg.mxu0
        %vm1105 = vcmask 236544
        %v1107 = vsel %vm1105, %v1005, 0
        %v1110 = vsel %vm1105, %v1006, 0
        %vm1112 = vcmask 1044480
        %v1114 = vsel %vm1112, %v1103, 0
        %1116 = vmatpush.msra.mxu0 0.0
        %1117 = vmatpush.msra.mxu0 0.0
        %1118 = vmatpush.msra.mxu0 0.0
        %1119 = vmatpush.msra.mxu0 0.0
        %1120 = vmatpush.msra.mxu0 0.0
        %1121 = vmatpush.msra.mxu0 0.0
        %1122 = vmatpush.msra.mxu0 0.0
        %1123 = vmatpush.msra.mxu0 0.0
        %1124 = vmatpush.msra.mxu0 0.0
        %1125 = vmatpush.msra.mxu0 0.0
        %1126 = vmatpush.msra.mxu0 0.0
        %1127 = vmatpush.msra.mxu0 0.0
        %1128 = vmatpush.msra.mxu0 %v1114
        %1129 = vmatpush.msra.mxu0 %v1100
        %1130 = vmatpush.msra.mxu0 %v1097
        %1131 = vmatpush.msra.mxu0 %v1094
        %1132 = vmatmul.f32.gmra.mxu0 %v1107
        %v1133 = vpop.f32.mrf.mxu0
        %v1134 = vadd.f32 0.0, %v1133
        %1135 = vmatmul.f32.gmra.mxu0 %v1110
        %v1136 = vpop.f32.mrf.mxu0
        %v1137 = vadd.f32 0.0, %v1136
        %1138 = vdwg.mxu0
        %v1139 = vld [vmem:[#allocation8] sm:$0xff]
        %v1140 = vld [vmem:[#allocation8 + $0x8] sm:$0xff]
        %v1141 = vld [vmem:[#allocation8 + $0x10] sm:$0xff]
        %v1142 = vld [vmem:[#allocation8 + $0x18] sm:$0xff]
        %v1143 = vld [vmem:[#allocation8 + $0x20] sm:$0xff]
        %v1144 = vld [vmem:[#allocation8 + $0x28] sm:$0xff]
        %v1145 = vld [vmem:[#allocation8 + $0x30] sm:$0xff]
        %v1146 = vld [vmem:[#allocation8 + $0x38] sm:$0xff]
        %v1147 = vld [vmem:[#allocation8 + $0x40] sm:$0xff]
        %v1148 = vld [vmem:[#allocation8 + $0x48] sm:$0xff]
        %v1149 = vld [vmem:[#allocation8 + $0x50] sm:$0xff]
        %v1150 = vld [vmem:[#allocation8 + $0x58] sm:$0xff]
        %v1151 = vld [vmem:[#allocation8 + $0x60] sm:$0xff]
        %v1152 = vld [vmem:[#allocation8 + $0x68] sm:$0xff]
        %v1153 = vld [vmem:[#allocation8 + $0x70] sm:$0xff]
        %v1154 = vld [vmem:[#allocation8 + $0x78] sm:$0xff]
        %v1155 = vld [vmem:[#allocation8 + $0x80] sm:$0xff]
        %v1156 = vld [vmem:[#allocation8 + $0x88] sm:$0xff]
        %v1157 = vld [vmem:[#allocation8 + $0x90] sm:$0xff]
        %v1158 = vld [vmem:[#allocation8 + $0x98] sm:$0xff]
        %v1159 = vld [vmem:[#allocation8 + $0xa0] sm:$0xff]
        %v1160 = vld [vmem:[#allocation8 + $0xa8] sm:$0xff]
        %v1161 = vld [vmem:[#allocation8 + $0xb0] sm:$0x3]
        %v1162 = vld [vmem:[#allocation8 + $0xb8] sm:$0x3]
        %s1163 = scalar_lea.vmem [#allocation8], 192
        %v1164 = vld [vmem:[%s1163] sm:$0xff]
        %v1165 = vld [vmem:[%s1163 + $0x8] sm:$0xff]
        %v1166 = vld [vmem:[%s1163 + $0x10] sm:$0xff]
        %v1167 = vld [vmem:[%s1163 + $0x18] sm:$0xff]
        %v1168 = vld [vmem:[%s1163 + $0x20] sm:$0xff]
        %v1169 = vld [vmem:[%s1163 + $0x28] sm:$0xff]
        %v1170 = vld [vmem:[%s1163 + $0x30] sm:$0xff]
        %v1171 = vld [vmem:[%s1163 + $0x38] sm:$0xff]
        %v1172 = vld [vmem:[%s1163 + $0x40] sm:$0xff]
        %v1173 = vld [vmem:[%s1163 + $0x48] sm:$0xff]
        %v1174 = vld [vmem:[%s1163 + $0x50] sm:$0xff]
        %v1175 = vld [vmem:[%s1163 + $0x58] sm:$0xff]
        %v1176 = vld [vmem:[%s1163 + $0x60] sm:$0xff]
        %v1177 = vld [vmem:[%s1163 + $0x68] sm:$0xff]
        %v1178 = vld [vmem:[%s1163 + $0x70] sm:$0xff]
        %v1179 = vld [vmem:[%s1163 + $0x78] sm:$0xff]
        %v1180 = vld [vmem:[%s1163 + $0x80] sm:$0xff]
        %v1181 = vld [vmem:[%s1163 + $0x88] sm:$0xff]
        %v1182 = vld [vmem:[%s1163 + $0x90] sm:$0xff]
        %v1183 = vld [vmem:[%s1163 + $0x98] sm:$0xff]
        %v1184 = vld [vmem:[%s1163 + $0xa0] sm:$0xff]
        %v1185 = vld [vmem:[%s1163 + $0xa8] sm:$0xff]
        %v1186 = vld [vmem:[%s1163 + $0xb0] sm:$0x3]
        %v1187 = vld [vmem:[%s1163 + $0xb8] sm:$0x3]
        %v1190 = vrot.slane %v1134, 1
        %v1191 = vrot.slane %v1137, 1
        %v1192 = vsel %vm668, %v1190, %v1191
        %vm1193 = vcmask 736256
        %v1194 = vsel %vm1193, %v1192, 0
        %v1196 = vsel %vm1193, %v1191, 0
        %vm1198 = vcmask 1041408
        %v1200 = vsel %vm1198, %v1186, 0
        %v1203 = vsel %vm1198, %v1187, 0
        %1205 = vmatpush.msra.mxu0 0.0
        %1206 = vmatpush.msra.mxu0 0.0
        %1207 = vmatpush.msra.mxu0 0.0
        %1208 = vmatpush.msra.mxu0 0.0
        %1209 = vmatpush.msra.mxu0 %v1200
        %1210 = vmatpush.msra.mxu0 %v1184
        %1211 = vmatpush.msra.mxu0 %v1182
        %1212 = vmatpush.msra.mxu0 %v1180
        %1213 = vmatpush.msra.mxu0 %v1178
        %1214 = vmatpush.msra.mxu0 %v1176
        %1215 = vmatpush.msra.mxu0 %v1174
        %1216 = vmatpush.msra.mxu0 %v1172
        %1217 = vmatpush.msra.mxu0 %v1170
        %1218 = vmatpush.msra.mxu0 %v1168
        %1219 = vmatpush.msra.mxu0 %v1166
        %1220 = vmatpush.msra.mxu0 %v1164
        %1221 = vmatmul.f32.gmra.mxu0 %v1194
        %v1222 = vpop.f32.mrf.mxu0
        %v1223 = vadd.f32 0.0, %v1222
        %1224 = vmatmul.f32.gmra.mxu0 %v1196
        %v1225 = vpop.f32.mrf.mxu0
        %v1226 = vadd.f32 0.0, %v1225
        %1227 = vdwg.mxu0
        %1228 = vmatpush.msra.mxu0 0.0
        %1229 = vmatpush.msra.mxu0 0.0
        %1230 = vmatpush.msra.mxu0 0.0
        %1231 = vmatpush.msra.mxu0 0.0
        %1232 = vmatpush.msra.mxu0 %v1203
        %1233 = vmatpush.msra.mxu0 %v1185
        %1234 = vmatpush.msra.mxu0 %v1183
        %1235 = vmatpush.msra.mxu0 %v1181
        %1236 = vmatpush.msra.mxu0 %v1179
        %1237 = vmatpush.msra.mxu0 %v1177
        %1238 = vmatpush.msra.mxu0 %v1175
        %1239 = vmatpush.msra.mxu0 %v1173
        %1240 = vmatpush.msra.mxu0 %v1171
        %1241 = vmatpush.msra.mxu0 %v1169
        %1242 = vmatpush.msra.mxu0 %v1167
        %1243 = vmatpush.msra.mxu0 %v1165
        %1244 = vmatmul.f32.gmra.mxu0 %v1194
        %v1245 = vpop.f32.mrf.mxu0
        %v1246 = vadd.f32 0.0, %v1245
        %1247 = vmatmul.f32.gmra.mxu0 %v1196
        %v1248 = vpop.f32.mrf.mxu0
        %v1249 = vadd.f32 0.0, %v1248
        %1250 = vdwg.mxu0
        %v1251 = vsel %vm1193, %v1134, 0
        %v1253 = vsel %vm1193, %v1137, 0
        %v1256 = vsel %vm1198, %v1161, 0
        %v1259 = vsel %vm1198, %v1162, 0
        %1261 = vmatpush.msra.mxu0 0.0
        %1262 = vmatpush.msra.mxu0 0.0
        %1263 = vmatpush.msra.mxu0 0.0
        %1264 = vmatpush.msra.mxu0 0.0
        %1265 = vmatpush.msra.mxu0 %v1256
        %1266 = vmatpush.msra.mxu0 %v1159
        %1267 = vmatpush.msra.mxu0 %v1157
        %1268 = vmatpush.msra.mxu0 %v1155
        %1269 = vmatpush.msra.mxu0 %v1153
        %1270 = vmatpush.msra.mxu0 %v1151
        %1271 = vmatpush.msra.mxu0 %v1149
        %1272 = vmatpush.msra.mxu0 %v1147
        %1273 = vmatpush.msra.mxu0 %v1145
        %1274 = vmatpush.msra.mxu0 %v1143
        %1275 = vmatpush.msra.mxu0 %v1141
        %1276 = vmatpush.msra.mxu0 %v1139
        %1277 = vmatmul.f32.gmra.mxu0 %v1251
        %v1278 = vpop.f32.mrf.mxu0
        %v1279 = vadd.f32 %v1223, %v1278
        %1280 = vmatmul.f32.gmra.mxu0 %v1253
        %v1281 = vpop.f32.mrf.mxu0
        %v1282 = vadd.f32 %v1226, %v1281
        %1283 = vdwg.mxu0
        %1284 = vmatpush.msra.mxu0 0.0
        %1285 = vmatpush.msra.mxu0 0.0
        %1286 = vmatpush.msra.mxu0 0.0
        %1287 = vmatpush.msra.mxu0 0.0
        %1288 = vmatpush.msra.mxu0 %v1259
        %1289 = vmatpush.msra.mxu0 %v1160
        %1290 = vmatpush.msra.mxu0 %v1158
        %1291 = vmatpush.msra.mxu0 %v1156
        %1292 = vmatpush.msra.mxu0 %v1154
        %1293 = vmatpush.msra.mxu0 %v1152
        %1294 = vmatpush.msra.mxu0 %v1150
        %1295 = vmatpush.msra.mxu0 %v1148
        %1296 = vmatpush.msra.mxu0 %v1146
        %1297 = vmatpush.msra.mxu0 %v1144
        %1298 = vmatpush.msra.mxu0 %v1142
        %1299 = vmatpush.msra.mxu0 %v1140
        %1300 = vmatmul.f32.gmra.mxu0 %v1251
        %v1301 = vpop.f32.mrf.mxu0
        %v1302 = vadd.f32 %v1246, %v1301
        %1303 = vmatmul.f32.gmra.mxu0 %v1253
        %v1304 = vpop.f32.mrf.mxu0
        %v1305 = vadd.f32 %v1249, %v1304
        %1306 = vdwg.mxu0
        %s1307 = scalar_lea.vmem [#allocation8], 384
        %v1308 = vld [vmem:[%s1307] sm:$0xff]
        %v1309 = vld [vmem:[%s1307 + $0x8] sm:$0xff]
        %v1310 = vld [vmem:[%s1307 + $0x10] sm:$0xff]
        %v1311 = vld [vmem:[%s1307 + $0x18] sm:$0xff]
        %v1312 = vld [vmem:[%s1307 + $0x20] sm:$0xff]
        %v1313 = vld [vmem:[%s1307 + $0x28] sm:$0xff]
        %v1314 = vld [vmem:[%s1307 + $0x30] sm:$0xff]
        %v1315 = vld [vmem:[%s1307 + $0x38] sm:$0xff]
        %v1316 = vld [vmem:[%s1307 + $0x40] sm:$0xff]
        %v1317 = vld [vmem:[%s1307 + $0x48] sm:$0xff]
        %v1318 = vld [vmem:[%s1307 + $0x50] sm:$0xff]
        %v1319 = vld [vmem:[%s1307 + $0x58] sm:$0xff]
        %v1320 = vld [vmem:[%s1307 + $0x60] sm:$0xff]
        %v1321 = vld [vmem:[%s1307 + $0x68] sm:$0xff]
        %v1322 = vld [vmem:[%s1307 + $0x70] sm:$0xff]
        %v1323 = vld [vmem:[%s1307 + $0x78] sm:$0xff]
        %v1324 = vld [vmem:[%s1307 + $0x80] sm:$0xff]
        %v1325 = vld [vmem:[%s1307 + $0x88] sm:$0xff]
        %v1326 = vld [vmem:[%s1307 + $0x90] sm:$0xff]
        %v1327 = vld [vmem:[%s1307 + $0x98] sm:$0xff]
        %v1328 = vld [vmem:[%s1307 + $0xa0] sm:$0xff]
        %v1329 = vld [vmem:[%s1307 + $0xa8] sm:$0xff]
        %v1330 = vld [vmem:[%s1307 + $0xb0] sm:$0x3]
        %v1331 = vld [vmem:[%s1307 + $0xb8] sm:$0x3]
        %v1332 = vrot.slane %v1134, 2
        %v1333 = vrot.slane %v1137, 2
        %v1334 = vsel %vm818, %v1332, %v1333
        %v1335 = vsel %vm1193, %v1334, 0
        %v1337 = vsel %vm1193, %v1333, 0
        %v1340 = vsel %vm1198, %v1330, 0
        %v1343 = vsel %vm1198, %v1331, 0
        %1345 = vmatpush.msra.mxu0 0.0
        %1346 = vmatpush.msra.mxu0 0.0
        %1347 = vmatpush.msra.mxu0 0.0
        %1348 = vmatpush.msra.mxu0 0.0
        %1349 = vmatpush.msra.mxu0 %v1340
        %1350 = vmatpush.msra.mxu0 %v1328
        %1351 = vmatpush.msra.mxu0 %v1326
        %1352 = vmatpush.msra.mxu0 %v1324
        %1353 = vmatpush.msra.mxu0 %v1322
        %1354 = vmatpush.msra.mxu0 %v1320
        %1355 = vmatpush.msra.mxu0 %v1318
        %1356 = vmatpush.msra.mxu0 %v1316
        %1357 = vmatpush.msra.mxu0 %v1314
        %1358 = vmatpush.msra.mxu0 %v1312
        %1359 = vmatpush.msra.mxu0 %v1310
        %1360 = vmatpush.msra.mxu0 %v1308
        %1361 = vmatmul.f32.gmra.mxu0 %v1335
        %v1362 = vpop.f32.mrf.mxu0
        %v1363 = vadd.f32 0.0, %v1362
        %1364 = vmatmul.f32.gmra.mxu0 %v1337
        %v1365 = vpop.f32.mrf.mxu0
        %v1366 = vadd.f32 0.0, %v1365
        %1367 = vdwg.mxu0
        %1368 = vmatpush.msra.mxu0 0.0
        %1369 = vmatpush.msra.mxu0 0.0
        %1370 = vmatpush.msra.mxu0 0.0
        %1371 = vmatpush.msra.mxu0 0.0
        %1372 = vmatpush.msra.mxu0 %v1343
        %1373 = vmatpush.msra.mxu0 %v1329
        %1374 = vmatpush.msra.mxu0 %v1327
        %1375 = vmatpush.msra.mxu0 %v1325
        %1376 = vmatpush.msra.mxu0 %v1323
        %1377 = vmatpush.msra.mxu0 %v1321
        %1378 = vmatpush.msra.mxu0 %v1319
        %1379 = vmatpush.msra.mxu0 %v1317
        %1380 = vmatpush.msra.mxu0 %v1315
        %1381 = vmatpush.msra.mxu0 %v1313
        %1382 = vmatpush.msra.mxu0 %v1311
        %1383 = vmatpush.msra.mxu0 %v1309
        %1384 = vmatmul.f32.gmra.mxu0 %v1335
        %v1385 = vpop.f32.mrf.mxu0
        %v1386 = vadd.f32 0.0, %v1385
        %1387 = vmatmul.f32.gmra.mxu0 %v1337
        %v1388 = vpop.f32.mrf.mxu0
        %v1389 = vadd.f32 0.0, %v1388
        %1390 = vdwg.mxu0
        %v1391 = vadd.f32 %v1279, %v1363
        %v1392 = vadd.f32 %v1302, %v1386
        %v1393 = vadd.f32 %v1282, %v1366
        %v1394 = vadd.f32 %v1305, %v1389
        %v1395 = vld [vmem:[#allocation9] sm:$0x3]
        %v1397 = vperm.slane %v1395, 0
        %v1398 = vperm.slane %v1395, 1
        %v1401 = vadd.f32 %v1391, %v1397
        %v1402 = vadd.f32 %v1392, %v1398
        %v1403 = vadd.f32 %v1393, %v1397
        %v1404 = vadd.f32 %v1394, %v1398
        %v1405 = vmax.f32 %v1401, 0.0
        %v1406 = vmax.f32 %v1402, 0.0
        %v1407 = vmax.f32 %v1403, 0.0
        %v1408 = vmax.f32 %v1404, 0.0
        %v1413 = vrot.slane %v1405, 1
        %v1414 = vrot.slane %v1407, 1
        %v1415 = vsel %vm668, %v1413, %v1414
        %v1416 = vrot.slane %v1406, 1
        %v1417 = vrot.slane %v1408, 1
        %v1418 = vsel %vm668, %v1416, %v1417
        %v1423 = vmax.f32 %v1405, %v1415
        %v1424 = vmax.f32 %v1406, %v1418
        %v1425 = vmax.f32 %v1407, %v1414
        %v1426 = vmax.f32 %v1408, %v1417
        %1431 = vrot.lane.b32.xlu0 %v1423, 127
        %v1432 = vpop.permute.xlu0 %1431
        %1433 = vrot.lane.b32.xlu0 %v1424, 127
        %v1434 = vpop.permute.xlu0 %1433
        %1435 = vrot.lane.b32.xlu0 %v1425, 127
        %v1436 = vpop.permute.xlu0 %1435
        %1437 = vrot.lane.b32.xlu0 %v1426, 127
        %v1438 = vpop.permute.xlu0 %1437
        %v1439 = vsel %vm984, %v1432, %v1434
        %v1440 = vsel %vm984, %v1436, %v1438
        %v1445 = vmax.f32 %v1423, %v1439
        %v1446 = vmax.f32 %v1424, %v1434
        %v1447 = vmax.f32 %v1425, %v1440
        %v1448 = vmax.f32 %v1426, %v1438
        %v1449 = vld [vmem:[%s8] sm:$0x3f]
        %v1450 = vld [vmem:[%s7] sm:$0xff]
        %v1451 = vld [vmem:[%s7 + $0x8] sm:$0xff]
        %v1452 = vld [vmem:[%s7 + $0x10] sm:$0xff]
        %v1453 = vld [vmem:[%s7 + $0x18] sm:$0xff]
        %v1454 = vld [vmem:[%s7 + $0x20] sm:$0xff]
        %v1455 = vld [vmem:[%s7 + $0x28] sm:$0xff]
        %v1456 = vld [vmem:[%s7 + $0x30] sm:$0xff]
        %v1457 = vld [vmem:[%s7 + $0x38] sm:$0xff]
        %v1458 = vld [vmem:[%s7 + $0x40] sm:$0xff]
        %v1459 = vld [vmem:[%s7 + $0x48] sm:$0xff]
        %v1460 = vld [vmem:[%s7 + $0x50] sm:$0xff]
        %v1461 = vld [vmem:[%s7 + $0x58] sm:$0xff]
        %v1462 = vld [vmem:[%s7 + $0x60] sm:$0xff]
        %v1463 = vld [vmem:[%s7 + $0x68] sm:$0xff]
        %v1464 = vld [vmem:[%s7 + $0x70] sm:$0xff]
        %v1465 = vld [vmem:[%s7 + $0x78] sm:$0xff]
        %v1466 = vld [vmem:[%s7 + $0x80] sm:$0xff]
        %v1467 = vld [vmem:[%s7 + $0x88] sm:$0xff]
        %v1468 = vld [vmem:[%s7 + $0x90] sm:$0xff]
        %v1469 = vld [vmem:[%s7 + $0x98] sm:$0xff]
        %v1470 = vld [vmem:[%s7 + $0xa0] sm:$0xff]
        %v1471 = vld [vmem:[%s7 + $0xa8] sm:$0xff]
        %v1472 = vld [vmem:[%s7 + $0xb0] sm:$0xff]
        %v1473 = vld [vmem:[%s7 + $0xb8] sm:$0xff]
        %v1474 = vld [vmem:[%s7 + $0xc0] sm:$0xff]
        %v1475 = vld [vmem:[%s7 + $0xc8] sm:$0x7f]
        %vm1476 = vcmask 646144
        %v1478 = vsel %vm1476, %v1446, 0
        %v1481 = vsel %vm1476, %v1448, 0
        %v1484 = vsel %vm668, %v1475, 0
        %1486 = vmatpush.msra.mxu0 %v1465
        %1487 = vmatpush.msra.mxu0 %v1464
        %1488 = vmatpush.msra.mxu0 %v1463
        %1489 = vmatpush.msra.mxu0 %v1462
        %1490 = vmatpush.msra.mxu0 %v1461
        %1491 = vmatpush.msra.mxu0 %v1460
        %1492 = vmatpush.msra.mxu0 %v1459
        %1493 = vmatpush.msra.mxu0 %v1458
        %1494 = vmatpush.msra.mxu0 %v1457
        %1495 = vmatpush.msra.mxu0 %v1456
        %1496 = vmatpush.msra.mxu0 %v1455
        %1497 = vmatpush.msra.mxu0 %v1454
        %1498 = vmatpush.msra.mxu0 %v1453
        %1499 = vmatpush.msra.mxu0 %v1452
        %1500 = vmatpush.msra.mxu0 %v1451
        %1501 = vmatpush.msra.mxu0 %v1450
        %1502 = vmatmul.f32.gmra.mxu0 %v1445
        %v1503 = vpop.f32.mrf.mxu0
        %v1504 = vadd.f32 0.0, %v1503
        %1505 = vmatmul.f32.gmra.mxu0 %v1447
        %v1506 = vpop.f32.mrf.mxu0
        %v1507 = vadd.f32 0.0, %v1506
        %1508 = vdwg.mxu0
        %1509 = vmatpush.msra.mxu0 0.0
        %1510 = vmatpush.msra.mxu0 0.0
        %1511 = vmatpush.msra.mxu0 0.0
        %1512 = vmatpush.msra.mxu0 0.0
        %1513 = vmatpush.msra.mxu0 0.0
        %1514 = vmatpush.msra.mxu0 0.0
        %1515 = vmatpush.msra.mxu0 %v1484
        %1516 = vmatpush.msra.mxu0 %v1474
        %1517 = vmatpush.msra.mxu0 %v1473
        %1518 = vmatpush.msra.mxu0 %v1472
        %1519 = vmatpush.msra.mxu0 %v1471
        %1520 = vmatpush.msra.mxu0 %v1470
        %1521 = vmatpush.msra.mxu0 %v1469
        %1522 = vmatpush.msra.mxu0 %v1468
        %1523 = vmatpush.msra.mxu0 %v1467
        %1524 = vmatpush.msra.mxu0 %v1466
        %1525 = vmatmul.f32.gmra.mxu0 %v1478
        %v1526 = vpop.f32.mrf.mxu0
        %v1527 = vadd.f32 %v1504, %v1526
        %1528 = vmatmul.f32.gmra.mxu0 %v1481
        %v1529 = vpop.f32.mrf.mxu0
        %v1530 = vadd.f32 %v1507, %v1529
        %1531 = vdwg.mxu0
        %vm1532 = vcmask 97280
        %v1534 = vsel %vm1532, %v1449, 0
        %vm1536 = vcmask 1043456
        %v1538 = vsel %vm1536, %v1530, 0
        %1540 = vmatpush.msra.mxu0 0.0
        %1541 = vmatpush.msra.mxu0 0.0
        %1542 = vmatpush.msra.mxu0 0.0
        %1543 = vmatpush.msra.mxu0 0.0
        %1544 = vmatpush.msra.mxu0 0.0
        %1545 = vmatpush.msra.mxu0 0.0
        %1546 = vmatpush.msra.mxu0 0.0
        %1547 = vmatpush.msra.mxu0 0.0
        %1548 = vmatpush.msra.mxu0 0.0
        %1549 = vmatpush.msra.mxu0 0.0
        %1550 = vmatpush.msra.mxu0 0.0
        %1551 = vmatpush.msra.mxu0 0.0
        %1552 = vmatpush.msra.mxu0 0.0
        %1553 = vmatpush.msra.mxu0 0.0
        %1554 = vmatpush.msra.mxu0 %v1538
        %1555 = vmatpush.msra.mxu0 %v1527
        %1556 = vmatmul.f32.gmra.mxu0 %v1534
        %v1557 = vpop.f32.mrf.mxu0
        %v1558 = vadd.f32 0.0, %v1557
        %1559 = vdwg.mxu0
        %vm1560 = vcmp.lt.s32.totalorder %v638, 96
        %vm1561 = vmand %vm639, %vm1560
        %1562 = vst.msk [vmem:[#allocation2] sm:$0x1] %vm1561, %v1558
        %1564 = vst [vmem:[#allocation1] sm:$0xff] %v1558
        %s1565 = scalar_lea.vmem [#allocation1], 1
        %v1566 = vld [vmem:[%s1565] ss:$9 sm:$0xff]
        %1568 = vst.msk [vmem:[#allocation2 + $0x1] sm:$0x1] %vm1561, %v1566
        %1569 = vst [vmem:[#allocation1] sm:$0xff] %v1558
        %s1570 = scalar_lea.vmem [#allocation1], 2
        %v1571 = vld [vmem:[%s1570] ss:$9 sm:$0xff]
        %1573 = vst.msk [vmem:[#allocation2 + $0x2] sm:$0x1] %vm1561, %v1571
        %1574 = vst [vmem:[#allocation1] sm:$0xff] %v1558
        %s1575 = scalar_lea.vmem [#allocation1], 3
        %v1576 = vld [vmem:[%s1575] ss:$9 sm:$0xff]
        %1578 = vst.msk [vmem:[#allocation2 + $0x3] sm:$0x1] %vm1561, %v1576
        %1579 = vst [vmem:[#allocation1] sm:$0xff] %v1558
        %s1580 = scalar_lea.vmem [#allocation1], 4
        %v1581 = vld [vmem:[%s1580] ss:$9 sm:$0xff]
        %1583 = vst.msk [vmem:[#allocation2 + $0x4] sm:$0x1] %vm1561, %v1581
        %1584 = vst [vmem:[#allocation1] sm:$0xff] %v1558
        %s1585 = scalar_lea.vmem [#allocation1], 5
        %v1586 = vld [vmem:[%s1585] ss:$9 sm:$0xff]
        %1588 = vst.msk [vmem:[#allocation2 + $0x5] sm:$0x1] %vm1561, %v1586
        %v1589 = vld [vmem:[#allocation2] sm:$0x3f]
        %v1590 = vld [vmem:[#allocation11] sm:$0xff]
        %v1591 = vld [vmem:[#allocation11 + $0x8] sm:$0xff]
        %v1592 = vld [vmem:[#allocation11 + $0x10] sm:$0xff]
        %v1593 = vld [vmem:[#allocation11 + $0x18] sm:$0xff]
        %v1594 = vld [vmem:[#allocation11 + $0x20] sm:$0xff]
        %v1595 = vld [vmem:[#allocation11 + $0x28] sm:$0xff]
        %v1596 = vld [vmem:[#allocation11 + $0x30] sm:$0xff]
        %v1597 = vld [vmem:[#allocation11 + $0x38] sm:$0xff]
        %v1598 = vld [vmem:[#allocation11 + $0x40] sm:$0xff]
        %v1599 = vld [vmem:[#allocation11 + $0x48] sm:$0xff]
        %v1600 = vld [vmem:[#allocation11 + $0x50] sm:$0xff]
        %v1601 = vld [vmem:[#allocation11 + $0x58] sm:$0xff]
        %v1602 = vld [vmem:[#allocation11 + $0x60] sm:$0xff]
        %v1603 = vld [vmem:[#allocation11 + $0x68] sm:$0xff]
        %v1604 = vld [vmem:[#allocation11 + $0x70] sm:$0xff]
        %v1605 = vld [vmem:[#allocation11 + $0x78] sm:$0xff]
        %v1606 = vld [vmem:[#allocation11 + $0x80] sm:$0xff]
        %v1607 = vld [vmem:[#allocation11 + $0x88] sm:$0xff]
        %v1608 = vld [vmem:[#allocation11 + $0x90] sm:$0xff]
        %v1609 = vld [vmem:[#allocation11 + $0x98] sm:$0xff]
        %v1610 = vld [vmem:[#allocation11 + $0xa0] sm:$0xff]
        %v1611 = vld [vmem:[#allocation11 + $0xa8] sm:$0xff]
        %v1612 = vld [vmem:[#allocation11 + $0xb0] sm:$0xff]
        %v1613 = vld [vmem:[#allocation11 + $0xb8] sm:$0xff]
        %v1614 = vld [vmem:[#allocation11 + $0xc0] sm:$0xff]
        %v1615 = vld [vmem:[#allocation11 + $0xc8] sm:$0xff]
        %v1616 = vld [vmem:[#allocation11 + $0xd0] sm:$0xff]
        %v1617 = vld [vmem:[#allocation11 + $0xd8] sm:$0xff]
        %v1618 = vld [vmem:[#allocation11 + $0xe0] sm:$0xff]
        %v1619 = vld [vmem:[#allocation11 + $0xe8] sm:$0xff]
        %v1620 = vld [vmem:[#allocation11 + $0xf0] sm:$0xff]
        %v1621 = vld [vmem:[#allocation11 + $0xf8] sm:$0xff]
        %v1622 = vld [vmem:[#allocation11 + $0x100] sm:$0xff]
        %v1623 = vld [vmem:[#allocation11 + $0x108] sm:$0xff]
        %v1624 = vld [vmem:[#allocation11 + $0x110] sm:$0xff]
        %v1625 = vld [vmem:[#allocation11 + $0x118] sm:$0xff]
        %v1626 = vld [vmem:[#allocation11 + $0x120] sm:$0xff]
        %v1627 = vld [vmem:[#allocation11 + $0x128] sm:$0xff]
        %v1628 = vld [vmem:[#allocation11 + $0x130] sm:$0xff]
        %v1629 = vld [vmem:[#allocation11 + $0x138] sm:$0xff]
        %v1630 = vld [vmem:[#allocation11 + $0x140] sm:$0xff]
        %v1631 = vld [vmem:[#allocation11 + $0x148] sm:$0xff]
        %v1632 = vld [vmem:[#allocation11 + $0x150] sm:$0xff]
        %v1633 = vld [vmem:[#allocation11 + $0x158] sm:$0xff]
        %v1634 = vld [vmem:[#allocation11 + $0x160] sm:$0xff]
        %v1635 = vld [vmem:[#allocation11 + $0x168] sm:$0xff]
        %v1636 = vld [vmem:[#allocation11 + $0x170] sm:$0xff]
        %v1637 = vld [vmem:[#allocation11 + $0x178] sm:$0xff]
        %v1638 = vld [vmem:[#allocation11 + $0x180] sm:$0xff]
        %v1639 = vld [vmem:[#allocation11 + $0x188] sm:$0xff]
        %v1640 = vld [vmem:[#allocation11 + $0x190] sm:$0xff]
        %v1641 = vld [vmem:[#allocation11 + $0x198] sm:$0xff]
        %v1642 = vld [vmem:[#allocation11 + $0x1a0] sm:$0xff]
        %v1643 = vld [vmem:[#allocation11 + $0x1a8] sm:$0xff]
        %v1644 = vld [vmem:[#allocation11 + $0x1b0] sm:$0xff]
        %v1645 = vld [vmem:[#allocation11 + $0x1b8] sm:$0xff]
        %v1646 = vld [vmem:[#allocation11 + $0x1c0] sm:$0xff]
        %v1647 = vld [vmem:[#allocation11 + $0x1c8] sm:$0xff]
        %v1648 = vld [vmem:[#allocation11 + $0x1d0] sm:$0xff]
        %v1649 = vld [vmem:[#allocation11 + $0x1d8] sm:$0xff]
        %v1650 = vld [vmem:[#allocation11 + $0x1e0] sm:$0xff]
        %v1651 = vld [vmem:[#allocation11 + $0x1e8] sm:$0xff]
        %v1652 = vld [vmem:[#allocation11 + $0x1f0] sm:$0xff]
        %v1653 = vld [vmem:[#allocation11 + $0x1f8] sm:$0xff]
        %v1654 = vld [vmem:[#allocation11 + $0x200] sm:$0xff]
        %v1655 = vld [vmem:[#allocation11 + $0x208] sm:$0xff]
        %v1656 = vld [vmem:[#allocation11 + $0x210] sm:$0xff]
        %v1657 = vld [vmem:[#allocation11 + $0x218] sm:$0xff]
        %v1658 = vld [vmem:[#allocation11 + $0x220] sm:$0xff]
        %v1659 = vld [vmem:[#allocation11 + $0x228] sm:$0xff]
        %v1660 = vld [vmem:[#allocation11 + $0x230] sm:$0xff]
        %v1661 = vld [vmem:[#allocation11 + $0x238] sm:$0xff]
        %v1662 = vld [vmem:[#allocation11 + $0x240] sm:$0xff]
        %v1663 = vld [vmem:[#allocation11 + $0x248] sm:$0xff]
        %v1664 = vld [vmem:[#allocation11 + $0x250] sm:$0xff]
        %v1665 = vld [vmem:[#allocation11 + $0x258] sm:$0xff]
        %v1666 = vld [vmem:[#allocation11 + $0x260] sm:$0xff]
        %v1667 = vld [vmem:[#allocation11 + $0x268] sm:$0xff]
        %v1668 = vld [vmem:[#allocation11 + $0x270] sm:$0xff]
        %v1669 = vld [vmem:[#allocation11 + $0x278] sm:$0xff]
        %v1670 = vld [vmem:[#allocation11 + $0x280] sm:$0xff]
        %v1671 = vld [vmem:[#allocation11 + $0x288] sm:$0xff]
        %v1672 = vld [vmem:[#allocation11 + $0x290] sm:$0xff]
        %v1673 = vld [vmem:[#allocation11 + $0x298] sm:$0xff]
        %v1674 = vld [vmem:[#allocation11 + $0x2a0] sm:$0xff]
        %v1675 = vld [vmem:[#allocation11 + $0x2a8] sm:$0xff]
        %v1676 = vld [vmem:[#allocation11 + $0x2b0] sm:$0xff]
        %v1677 = vld [vmem:[#allocation11 + $0x2b8] sm:$0xff]
        %v1678 = vld [vmem:[#allocation11 + $0x2c0] sm:$0xff]
        %v1679 = vld [vmem:[#allocation11 + $0x2c8] sm:$0xff]
        %v1680 = vld [vmem:[#allocation11 + $0x2d0] sm:$0xff]
        %v1681 = vld [vmem:[#allocation11 + $0x2d8] sm:$0xff]
        %v1682 = vld [vmem:[#allocation11 + $0x2e0] sm:$0xff]
        %v1683 = vld [vmem:[#allocation11 + $0x2e8] sm:$0xff]
        %v1684 = vld [vmem:[#allocation11 + $0x2f0] sm:$0xff]
        %v1685 = vld [vmem:[#allocation11 + $0x2f8] sm:$0xff]
        %v1686 = vld [vmem:[#allocation12] sm:$0x1]
        %v1688 = vperm.slane %v1589, 0
        %v1689 = vperm.slane %v1589, 1
        %v1690 = vperm.slane %v1589, 2
        %v1691 = vperm.slane %v1589, 3
        %v1692 = vperm.slane %v1589, 4
        %v1693 = vperm.slane %v1589, 5
        %1700 = vmatpush.msra.mxu0 %v1605
        %1701 = vmatpush.msra.mxu0 %v1604
        %1702 = vmatpush.msra.mxu0 %v1603
        %1703 = vmatpush.msra.mxu0 %v1602
        %1704 = vmatpush.msra.mxu0 %v1601
        %1705 = vmatpush.msra.mxu0 %v1600
        %1706 = vmatpush.msra.mxu0 %v1599
        %1707 = vmatpush.msra.mxu0 %v1598
        %1708 = vmatpush.msra.mxu0 %v1597
        %1709 = vmatpush.msra.mxu0 %v1596
        %1710 = vmatpush.msra.mxu0 %v1595
        %1711 = vmatpush.msra.mxu0 %v1594
        %1712 = vmatpush.msra.mxu0 %v1593
        %1713 = vmatpush.msra.mxu0 %v1592
        %1714 = vmatpush.msra.mxu0 %v1591
        %1715 = vmatpush.msra.mxu0 %v1590
        %1716 = vmatmul.f32.gmra.mxu0 %v1688
        %v1717 = vpop.f32.mrf.mxu0
        %v1718 = vadd.f32 %v1686, %v1717
        %1719 = vdwg.mxu0
        %1720 = vmatpush.msra.mxu0 %v1621
        %1721 = vmatpush.msra.mxu0 %v1620
        %1722 = vmatpush.msra.mxu0 %v1619
        %1723 = vmatpush.msra.mxu0 %v1618
        %1724 = vmatpush.msra.mxu0 %v1617
        %1725 = vmatpush.msra.mxu0 %v1616
        %1726 = vmatpush.msra.mxu0 %v1615
        %1727 = vmatpush.msra.mxu0 %v1614
        %1728 = vmatpush.msra.mxu0 %v1613
        %1729 = vmatpush.msra.mxu0 %v1612
        %1730 = vmatpush.msra.mxu0 %v1611
        %1731 = vmatpush.msra.mxu0 %v1610
        %1732 = vmatpush.msra.mxu0 %v1609
        %1733 = vmatpush.msra.mxu0 %v1608
        %1734 = vmatpush.msra.mxu0 %v1607
        %1735 = vmatpush.msra.mxu0 %v1606
        %1736 = vmatmul.f32.gmra.mxu0 %v1689
        %v1737 = vpop.f32.mrf.mxu0
        %v1738 = vadd.f32 %v1718, %v1737
        %1739 = vdwg.mxu0
        %1740 = vmatpush.msra.mxu0 %v1637
        %1741 = vmatpush.msra.mxu0 %v1636
        %1742 = vmatpush.msra.mxu0 %v1635
        %1743 = vmatpush.msra.mxu0 %v1634
        %1744 = vmatpush.msra.mxu0 %v1633
        %1745 = vmatpush.msra.mxu0 %v1632
        %1746 = vmatpush.msra.mxu0 %v1631
        %1747 = vmatpush.msra.mxu0 %v1630
        %1748 = vmatpush.msra.mxu0 %v1629
        %1749 = vmatpush.msra.mxu0 %v1628
        %1750 = vmatpush.msra.mxu0 %v1627
        %1751 = vmatpush.msra.mxu0 %v1626
        %1752 = vmatpush.msra.mxu0 %v1625
        %1753 = vmatpush.msra.mxu0 %v1624
        %1754 = vmatpush.msra.mxu0 %v1623
        %1755 = vmatpush.msra.mxu0 %v1622
        %1756 = vmatmul.f32.gmra.mxu0 %v1690
        %v1757 = vpop.f32.mrf.mxu0
        %v1758 = vadd.f32 %v1738, %v1757
        %1759 = vdwg.mxu0
        %1760 = vmatpush.msra.mxu0 %v1653
        %1761 = vmatpush.msra.mxu0 %v1652
        %1762 = vmatpush.msra.mxu0 %v1651
        %1763 = vmatpush.msra.mxu0 %v1650
        %1764 = vmatpush.msra.mxu0 %v1649
        %1765 = vmatpush.msra.mxu0 %v1648
        %1766 = vmatpush.msra.mxu0 %v1647
        %1767 = vmatpush.msra.mxu0 %v1646
        %1768 = vmatpush.msra.mxu0 %v1645
        %1769 = vmatpush.msra.mxu0 %v1644
        %1770 = vmatpush.msra.mxu0 %v1643
        %1771 = vmatpush.msra.mxu0 %v1642
        %1772 = vmatpush.msra.mxu0 %v1641
        %1773 = vmatpush.msra.mxu0 %v1640
        %1774 = vmatpush.msra.mxu0 %v1639
        %1775 = vmatpush.msra.mxu0 %v1638
        %1776 = vmatmul.f32.gmra.mxu0 %v1691
        %v1777 = vpop.f32.mrf.mxu0
        %v1778 = vadd.f32 %v1758, %v1777
        %1779 = vdwg.mxu0
        %1780 = vmatpush.msra.mxu0 %v1669
        %1781 = vmatpush.msra.mxu0 %v1668
        %1782 = vmatpush.msra.mxu0 %v1667
        %1783 = vmatpush.msra.mxu0 %v1666
        %1784 = vmatpush.msra.mxu0 %v1665
        %1785 = vmatpush.msra.mxu0 %v1664
        %1786 = vmatpush.msra.mxu0 %v1663
        %1787 = vmatpush.msra.mxu0 %v1662
        %1788 = vmatpush.msra.mxu0 %v1661
        %1789 = vmatpush.msra.mxu0 %v1660
        %1790 = vmatpush.msra.mxu0 %v1659
        %1791 = vmatpush.msra.mxu0 %v1658
        %1792 = vmatpush.msra.mxu0 %v1657
        %1793 = vmatpush.msra.mxu0 %v1656
        %1794 = vmatpush.msra.mxu0 %v1655
        %1795 = vmatpush.msra.mxu0 %v1654
        %1796 = vmatmul.f32.gmra.mxu0 %v1692
        %v1797 = vpop.f32.mrf.mxu0
        %v1798 = vadd.f32 %v1778, %v1797
        %1799 = vdwg.mxu0
        %1800 = vmatpush.msra.mxu0 %v1685
        %1801 = vmatpush.msra.mxu0 %v1684
        %1802 = vmatpush.msra.mxu0 %v1683
        %1803 = vmatpush.msra.mxu0 %v1682
        %1804 = vmatpush.msra.mxu0 %v1681
        %1805 = vmatpush.msra.mxu0 %v1680
        %1806 = vmatpush.msra.mxu0 %v1679
        %1807 = vmatpush.msra.mxu0 %v1678
        %1808 = vmatpush.msra.mxu0 %v1677
        %1809 = vmatpush.msra.mxu0 %v1676
        %1810 = vmatpush.msra.mxu0 %v1675
        %1811 = vmatpush.msra.mxu0 %v1674
        %1812 = vmatpush.msra.mxu0 %v1673
        %1813 = vmatpush.msra.mxu0 %v1672
        %1814 = vmatpush.msra.mxu0 %v1671
        %1815 = vmatpush.msra.mxu0 %v1670
        %1816 = vmatmul.f32.gmra.mxu0 %v1693
        %v1817 = vpop.f32.mrf.mxu0
        %v1818 = vadd.f32 %v1798, %v1817
        %1819 = vdwg.mxu0
        %v1820 = vmax.f32 %v1818, 0.0
        %v1821 = vld [vmem:[#allocation14] sm:$0xff]
        %v1822 = vld [vmem:[#allocation14 + $0x8] sm:$0xff]
        %v1823 = vld [vmem:[#allocation14 + $0x10] sm:$0xff]
        %v1824 = vld [vmem:[#allocation14 + $0x18] sm:$0xff]
        %v1825 = vld [vmem:[#allocation14 + $0x20] sm:$0xff]
        %v1826 = vld [vmem:[#allocation14 + $0x28] sm:$0xff]
        %v1827 = vld [vmem:[#allocation14 + $0x30] sm:$0xff]
        %v1828 = vld [vmem:[#allocation14 + $0x38] sm:$0xff]
        %v1829 = vld [vmem:[#allocation14 + $0x40] sm:$0xff]
        %v1830 = vld [vmem:[#allocation14 + $0x48] sm:$0xff]
        %v1831 = vld [vmem:[#allocation14 + $0x50] sm:$0xff]
        %v1832 = vld [vmem:[#allocation14 + $0x58] sm:$0xff]
        %v1833 = vld [vmem:[#allocation14 + $0x60] sm:$0xff]
        %v1834 = vld [vmem:[#allocation14 + $0x68] sm:$0xff]
        %v1835 = vld [vmem:[#allocation14 + $0x70] sm:$0xff]
        %v1836 = vld [vmem:[#allocation14 + $0x78] sm:$0xff]
        %v1837 = vld [vmem:[#allocation15] sm:$0x1]
        %1838 = vmatpush.msra.mxu0 %v1836
        %1839 = vmatpush.msra.mxu0 %v1835
        %1840 = vmatpush.msra.mxu0 %v1834
        %1841 = vmatpush.msra.mxu0 %v1833
        %1842 = vmatpush.msra.mxu0 %v1832
        %1843 = vmatpush.msra.mxu0 %v1831
        %1844 = vmatpush.msra.mxu0 %v1830
        %1845 = vmatpush.msra.mxu0 %v1829
        %1846 = vmatpush.msra.mxu0 %v1828
        %1847 = vmatpush.msra.mxu0 %v1827
        %1848 = vmatpush.msra.mxu0 %v1826
        %1849 = vmatpush.msra.mxu0 %v1825
        %1850 = vmatpush.msra.mxu0 %v1824
        %1851 = vmatpush.msra.mxu0 %v1823
        %1852 = vmatpush.msra.mxu0 %v1822
        %1853 = vmatpush.msra.mxu0 %v1821
        %1854 = vmatmul.f32.gmra.mxu0 %v1820
        %v1855 = vpop.f32.mrf.mxu0
        %v1856 = vadd.f32 %v1837, %v1855
        %1857 = vdwg.mxu0
        %v1858 = vmax.f32 %v1856, 0.0
        %v1859 = vld [vmem:[#allocation17] sm:$0xff]
        %v1860 = vld [vmem:[#allocation17 + $0x8] sm:$0xff]
        %v1861 = vld [vmem:[#allocation17 + $0x10] sm:$0xff]
        %v1862 = vld [vmem:[#allocation17 + $0x18] sm:$0xff]
        %v1863 = vld [vmem:[#allocation17 + $0x20] sm:$0xff]
        %v1864 = vld [vmem:[#allocation17 + $0x28] sm:$0xff]
        %v1865 = vld [vmem:[#allocation17 + $0x30] sm:$0xff]
        %v1866 = vld [vmem:[#allocation17 + $0x38] sm:$0xff]
        %v1867 = vld [vmem:[#allocation17 + $0x40] sm:$0xff]
        %v1868 = vld [vmem:[#allocation17 + $0x48] sm:$0xff]
        %v1869 = vld [vmem:[#allocation17 + $0x50] sm:$0xff]
        %v1870 = vld [vmem:[#allocation17 + $0x58] sm:$0xff]
        %v1871 = vld [vmem:[#allocation17 + $0x60] sm:$0xff]
        %v1872 = vld [vmem:[#allocation17 + $0x68] sm:$0xff]
        %v1873 = vld [vmem:[#allocation17 + $0x70] sm:$0xff]
        %v1874 = vld [vmem:[#allocation17 + $0x78] sm:$0xff]
        %v1875 = vld [vmem:[%s14] sm:$0x1]
        %1876 = vmatpush.msra.mxu0 %v1874
        %1877 = vmatpush.msra.mxu0 %v1873
        %1878 = vmatpush.msra.mxu0 %v1872
        %1879 = vmatpush.msra.mxu0 %v1871
        %1880 = vmatpush.msra.mxu0 %v1870
        %1881 = vmatpush.msra.mxu0 %v1869
        %1882 = vmatpush.msra.mxu0 %v1868
        %1883 = vmatpush.msra.mxu0 %v1867
        %1884 = vmatpush.msra.mxu0 %v1866
        %1885 = vmatpush.msra.mxu0 %v1865
        %1886 = vmatpush.msra.mxu0 %v1864
        %1887 = vmatpush.msra.mxu0 %v1863
        %1888 = vmatpush.msra.mxu0 %v1862
        %1889 = vmatpush.msra.mxu0 %v1861
        %1890 = vmatpush.msra.mxu0 %v1860
        %1891 = vmatpush.msra.mxu0 %v1859
        %1892 = vmatmul.f32.gmra.mxu0 %v1858
        %v1893 = vpop.f32.mrf.mxu0
        %v1894 = vadd.f32 %v1875, %v1893
        %1895 = vdwg.mxu0
        %1896 = vst [vmem:[%s637] sm:$0x1] %v1894
        %s1897 = sand.u32 %s364, 1
        %s1898 = scalar_lea.sflag [#allocation5], %s1897
        %s1899 = sand.u32 %s364, 1
        %s1900 = scalar_lea.vmem [#allocation18], %s1899
        // Predicated region
        $region117: #{simplenet_forward.1} parent=79 // pred_check
          %p1901 = pneg %p374
        $region118: #{simplenet_forward.1} parent=79 // pred_check_branch
          %1903 = sbr.rel (%p1901) target = $region120
        $region119: #{simplenet_forward.1} parent=79 // pred_region
          %1905 = vsyncadd %s1898, 0
          %s1906 = scalar_lea.hbm %s15, %s36
          %s1908 = sshll.u32 %s1900, 4
          %s1909 = int_to_ptr.vmem [resolvable:$true] %s1908
          %s1910 = sshll.u32 %s1906, 4
          %s1911 = int_to_ptr.hbm [resolvable:$true] %s1910
          %1913 = dma.vmem_to_hbm [thread:$0]  %s1909, 16, %s1911, %s1898
        $region120: #{simplenet_forward.1} parent=79 // pred_fallthru
          _
      $region80: #{simplenet_forward.1} parent=5 // pred_fallthru
        _
      %p1914 = scmp.le.s32.totalorder 2, %s31
      // Predicated region
      $region121: #{simplenet_forward.1} parent=5 // pred_check
        %p1915 = pneg %p1914
      $region122: #{simplenet_forward.1} parent=5 // pred_check_branch
        %1917 = sbr.rel (%p1915) target = $region124
      $region123: #{simplenet_forward.1} parent=5 // pred_region
        %s1918 = ssub.s32 %s31, 2
        // Predicated region
        $region125: #{simplenet_forward.1} parent=123 // pred_check
          %p1919 = pneg %p380
        $region126: #{simplenet_forward.1} parent=123 // pred_check_branch
          %1921 = sbr.rel (%p1919) target = $region128
        $region127: #{simplenet_forward.1} parent=123 // pred_region
          %s1922 = sand.u32 %s365, 1
          %s1923 = scalar_lea.sflag [#allocation5], %s1922
          %s1924 = sand.u32 %s365, 1
          %s1925 = scalar_lea.vmem [#allocation18], %s1924
          %1927 = dma.done %s1923, 16
        $region128: #{simplenet_forward.1} parent=123 // pred_fallthru
          _
      $region124: #{simplenet_forward.1} parent=5 // pred_fallthru
        _
    $region6: #{simplenet_forward.1} parent=1 // loop_footer
      %s35 = sadd.s32 1, %s31
    $region7: #{simplenet_forward.1} parent=1 // loop_footer_branch
      %30 = sbr.rel target = $region3
    $region8: #{simplenet_forward.1} parent=1 // loop_exit
      _
    %1928 = vsyncpa [#allocation4], 1
    %s1929 = scalar_lea.sflag [#allocation4], 1
    %1930 = vsyncpa %s1929, 1
    %1931 = vsyncpa [#allocation7], 1
    %1932 = vsyncpa [#allocation10], 1
    %1933 = vsyncpa [#allocation13], 1
    %1934 = vsyncpa [#allocation16], 1
    %1935 = vsyncpa [#allocation5], 1
    %s1936 = scalar_lea.sflag [#allocation5], 1
    %1937 = vsyncpa %s1936, 1

</llo_original>
